<compile_context>
chip_gen: v6e
topology: v6e:2x2x1
jax: 0.10.0
libtpu: 0.0.40
codegen_flags: <defaults>
</compile_context>

<pallas_src>
import math
import functools

import jax
import jax.numpy as jnp
from jax.experimental import pallas as pl
from jax.experimental.pallas import tpu as pltpu

# ----------------- config (small, synthetic, consistent with __init__) -------
N_AGENTS = 2
BS = 2
OBS_SHAPE = 6                        # args.obs_shape  -> action_dim
INPUT_SHAPE = OBS_SHAPE + N_AGENTS   # obs + agent-id one-hot (obs_agent_id=True)
ACTION_DIM = OBS_SHAPE
T_DIM = 16                           # sinusoidal time-embedding dim
HIDDEN = 64                          # Model_MLP hidden width
RNN_HIDDEN = 64                      # hid_s width (passthrough for MLP agent)
N_TIMESTEPS = 5
MAX_NOISE_RATIO = 0.1
BETA_START, BETA_END = 1e-4, 2e-2    # linear_beta_schedule
# clip_denoised=True, predict_epsilon=True (as in the reference config)

# ----- packed-weight row layout (all offsets are multiples of 8 sublanes) ----
ROW_W2 = 0                             # (HIDDEN, HIDDEN)
ROW_W3 = ROW_W2 + HIDDEN               # (HIDDEN, HIDDEN)
ROW_B = ROW_W3 + HIDDEN                # row ROW_B = b2, row ROW_B+1 = b3
ROW_W1X = ROW_B + 8                    # (ACTION_DIM, HIDDEN)
ROW_W1S = ROW_W1X + 8                  # (INPUT_SHAPE, HIDDEN)
ROW_TEMB = ROW_W1S + 8                 # (N_TIMESTEPS, HIDDEN)  temb@W1t + b1
WM_ROWS = ROW_TEMB + 8                 # = 160

ROW_WF = 0                             # (HIDDEN, ACTION_DIM)
ROW_BF = HIDDEN                        # (1, ACTION_DIM)
WO_ROWS = HIDDEN + 8                   # = 72

COEF_STRIDE = 8                        # per-timestep scalar stride in SMEM


# ----------------------------- Pallas kernel ---------------------------------
def _mish(v):
    # mish(v) = v * tanh(softplus(v)) = v * ((1+e^v)^2 - 1) / ((1+e^v)^2 + 1)
    # Clamp v at 20 before exp: for v > 20 the ratio is 1.0 to f32 precision,
    # so the result is still (correctly) ~v.  1 exp + 1 approx reciprocal.
    e = jnp.exp(jnp.minimum(v, 20.0))
    t = (1.0 + e) * (1.0 + e)
    return v * (t - 1.0) * pl.reciprocal(t + 1.0, approx=True)


def diffusion_sample_kernel(coef_ref,              # SMEM (N_TIMESTEPS*8,) f32
                            zx_ref,                # VMEM (N+1, B, A): noise + x_T
                            state_ref,             # VMEM (B, INPUT_SHAPE)
                            wm_ref,                # VMEM (WM_ROWS, HIDDEN) packed
                            wo_ref,                # VMEM (WO_ROWS, ACTION_DIM) packed
                            out_ref):              # VMEM (B, ACTION_DIM)
    # ---- unpack (all static, 8-aligned sublane slices), loaded once ----------
    x = zx_ref[N_TIMESTEPS]                        # (B, A): x_T ~ N(0, I)
    w2 = wm_ref[ROW_W2:ROW_W2 + HIDDEN, :]         # (H, H)
    w3 = wm_ref[ROW_W3:ROW_W3 + HIDDEN, :]         # (H, H)
    bb = wm_ref[ROW_B:ROW_B + 8, :]                # rows 0/1 = b2/b3
    b2 = bb[0:1, :]
    b3 = bb[1:2, :]
    w1x = wm_ref[ROW_W1X:ROW_W1X + ACTION_DIM, :]  # (A, H)
    w1s = wm_ref[ROW_W1S:ROW_W1S + INPUT_SHAPE, :]  # (S, H)
    temb = wm_ref[ROW_TEMB:ROW_TEMB + N_TIMESTEPS, :]  # (N, H): temb@W1t + b1
    wf = wo_ref[ROW_WF:ROW_WF + HIDDEN, :]         # (H, A)
    bf = wo_ref[ROW_BF:ROW_BF + 1, :]              # (1, A)

    # Loop-invariant layer-1 state projection (b1 is folded into temb rows).
    sbase = jnp.dot(state_ref[...], w1s, preferred_element_type=jnp.float32)

    # Fused, fully unrolled reverse-diffusion loop (N_TIMESTEPS small/static).
    for step in range(N_TIMESTEPS):
        i = N_TIMESTEPS - 1 - step
        o = i * COEF_STRIDE

        # Model_MLP eps-network: concat([x, t_emb, state]) @ W1 == sum of the
        # three projections; t/state parts are hoisted.
        h = _mish(jnp.dot(x, w1x, preferred_element_type=jnp.float32)
                  + sbase + temb[i:i + 1, :])
        h = _mish(jnp.dot(h, w2, preferred_element_type=jnp.float32) + b2)
        h = _mish(jnp.dot(h, w3, preferred_element_type=jnp.float32) + b3)
        eps = jnp.dot(h, wf, preferred_element_type=jnp.float32) + bf   # (B, A)

        # per-timestep scalar coefficients (extract(buffer, t, shape))
        sqrt_recip_ac = coef_ref[o + 0]    # sqrt(1/alphas_cumprod[t])
        sqrt_recipm1_ac = coef_ref[o + 1]  # sqrt(1/alphas_cumprod[t] - 1)
        mean_c1 = coef_ref[o + 2]          # posterior_mean_coef1[t]
        mean_c2 = coef_ref[o + 3]          # posterior_mean_coef2[t]
        noise_scale = coef_ref[o + 4]      # nonzero_mask*noise_ratio*exp(.5*logvar)

        # predict_start_from_noise (predict_epsilon=True) + clip_denoised
        x_recon = jnp.clip(sqrt_recip_ac * x - sqrt_recipm1_ac * eps, -1.0, 1.0)
        # q_posterior mean + p_sample noise injection
        x = mean_c1 * x_recon + mean_c2 * x + noise_scale * zx_ref[i]

    # sample(): action.clamp_(-1, 1)
    out_ref[...] = jnp.clip(x, -1.0, 1.0)


def diffusion_sample(coefs, zx, state, wm, wo):
    B = zx.shape[1]
    vmem = pl.BlockSpec(memory_space=pltpu.MemorySpace.VMEM)
    smem = pl.BlockSpec(memory_space=pltpu.MemorySpace.SMEM)
    return pl.pallas_call(
        diffusion_sample_kernel,
        out_shape=jax.ShapeDtypeStruct((B, ACTION_DIM), jnp.float32),
        in_specs=[smem, vmem, vmem, vmem, vmem],
        out_specs=vmem,
    )(coefs, zx, state, wm, wo)


# ----------------------------- JAX glue ---------------------------------------
def make_buffers(n_timesteps):
    betas = jnp.linspace(BETA_START, BETA_END, n_timesteps, dtype=jnp.float32)
    alphas = 1.0 - betas
    ac = jnp.cumprod(alphas)
    ac_prev = jnp.concatenate([jnp.ones((1,), jnp.float32), ac[:-1]])
    post_var = betas * (1.0 - ac_prev) / (1.0 - ac)
    return dict(
        betas=betas,
        alphas_cumprod=ac,
        sqrt_recip_alphas_cumprod=jnp.sqrt(1.0 / ac),
        sqrt_recipm1_alphas_cumprod=jnp.sqrt(1.0 / ac - 1.0),
        posterior_variance=post_var,
        posterior_log_variance_clipped=jnp.log(jnp.clip(post_var, 1e-20)),
        posterior_mean_coef1=betas * jnp.sqrt(ac_prev) / (1.0 - ac),
        posterior_mean_coef2=(1.0 - ac_prev) * jnp.sqrt(alphas) / (1.0 - ac),
    )


def init_params(key):
    ks = jax.random.split(key, 8)

    def w(k, i, o):
        return jax.random.normal(k, (i, o), jnp.float32) * (1.0 / math.sqrt(i))

    return dict(
        # time-embedding MLP: Linear(T, 2T) -> Mish -> Linear(2T, T)
        tw1=w(ks[0], T_DIM, 2 * T_DIM), tb1=jnp.zeros((1, 2 * T_DIM), jnp.float32),
        tw2=w(ks[1], 2 * T_DIM, T_DIM), tb2=jnp.zeros((1, T_DIM), jnp.float32),
        # main MLP first layer split over [x | t_emb | state]
        w1x=w(ks[2], ACTION_DIM, HIDDEN),
        w1t=w(ks[3], T_DIM, HIDDEN),
        w1s=w(ks[4], INPUT_SHAPE, HIDDEN),
        b1=jnp.zeros((1, HIDDEN), jnp.float32),
        w2=w(ks[5], HIDDEN, HIDDEN), b2=jnp.zeros((1, HIDDEN), jnp.float32),
        w3=w(ks[6], HIDDEN, HIDDEN), b3=jnp.zeros((1, HIDDEN), jnp.float32),
        wf=w(ks[7], HIDDEN, ACTION_DIM), bf=jnp.zeros((1, ACTION_DIM), jnp.float32),
    )


def _mish_host(v):
    return v * jnp.tanh(jax.nn.softplus(v))


def time_embeddings_all(params):
    # SinusoidalPosEmb + tiny time-MLP for ALL timesteps at once -> (N, T).
    half = T_DIM // 2
    scale = math.log(10000.0) / (half - 1)
    freqs = jnp.exp(jnp.arange(half, dtype=jnp.float32) * -scale)
    t = jnp.arange(N_TIMESTEPS, dtype=jnp.float32)[:, None]          # (N, 1)
    arg = t * freqs[None, :]
    emb = jnp.concatenate([jnp.sin(arg), jnp.cos(arg)], axis=-1)     # (N, T)
    h = _mish_host(emb @ params["tw1"] + params["tb1"])
    return h @ params["tw2"] + params["tb2"]                         # (N, T)


def pack_params(params):
    """One-time packing of all weights into 2 lane/sublane-friendly buffers."""
    wm = jnp.zeros((WM_ROWS, HIDDEN), jnp.float32)
    wm = wm.at[ROW_W2:ROW_W2 + HIDDEN].set(params["w2"])
    wm = wm.at[ROW_W3:ROW_W3 + HIDDEN].set(params["w3"])
    wm = wm.at[ROW_B].set(params["b2"][0])
    wm = wm.at[ROW_B + 1].set(params["b3"][0])
    wm = wm.at[ROW_W1X:ROW_W1X + ACTION_DIM].set(params["w1x"])
    wm = wm.at[ROW_W1S:ROW_W1S + INPUT_SHAPE].set(params["w1s"])
    # time embedding projected through layer-1 (+ b1), per timestep (N, H)
    temb_b1 = time_embeddings_all(params) @ params["w1t"] + params["b1"]
    wm = wm.at[ROW_TEMB:ROW_TEMB + N_TIMESTEPS].set(temb_b1)

    wo = jnp.zeros((WO_ROWS, ACTION_DIM), jnp.float32)
    wo = wo.at[ROW_WF:ROW_WF + HIDDEN].set(params["wf"])
    wo = wo.at[ROW_BF].set(params["bf"][0])
    return wm, wo


@functools.partial(jax.jit, static_argnames=("eval_mode",))
def diffusion_mac_forward(state, hid_s, buffers, wm, wo, key, eval_mode=False):
    """DiffusionMAC.forward == sample(): reverse diffusion p_sample_loop."""
    noise_ratio = 0.0 if eval_mode else MAX_NOISE_RATIO
    B = state.shape[0]

    # zx[N_TIMESTEPS] = x_T ~ N(0, I); zx[i] = per-step gaussian noise.
    zx = jax.random.normal(key, (N_TIMESTEPS + 1, B, ACTION_DIM), jnp.float32)

    # Per-timestep scalar coefficients, flattened to 1-D for cheap SMEM layout.
    nz = jnp.concatenate([jnp.zeros((1,), jnp.float32),
                          jnp.ones((N_TIMESTEPS - 1,), jnp.float32)])
    noise_scale = nz * noise_ratio * jnp.exp(
        0.5 * buffers["posterior_log_variance_clipped"])
    zeros = jnp.zeros((N_TIMESTEPS,), jnp.float32)
    coefs = jnp.stack(
        [buffers["sqrt_recip_alphas_cumprod"],
         buffers["sqrt_recipm1_alphas_cumprod"],
         buffers["posterior_mean_coef1"],
         buffers["posterior_mean_coef2"],
         noise_scale,
         zeros, zeros, zeros],
        axis=1).reshape(-1)                                   # (N*8,)

    action = diffusion_sample(coefs, zx, state, wm, wo)
    # ret['hidden_state'] — the MLP diffusion agent passes hid_s through unchanged.
    return action, {"hidden_state": hid_s}


# ------------------------- pure-JAX reference ---------------------------------
def reference_forward(state, params, buffers, key, eval_mode=False):
    noise_ratio = 0.0 if eval_mode else MAX_NOISE_RATIO
    B = state.shape[0]
    zx = jax.random.normal(key, (N_TIMESTEPS + 1, B, ACTION_DIM), jnp.float32)
    temb = time_embeddings_all(params)                        # (N, T)
    x = zx[N_TIMESTEPS]
    for i in reversed(range(N_TIMESTEPS)):
        t = temb[i][None, :]
        h = _mish_host(x @ params["w1x"] + t @ params["w1t"]
                       + state @ params["w1s"] + params["b1"])
        h = _mish_host(h @ params["w2"] + params["b2"])
        h = _mish_host(h @ params["w3"] + params["b3"])
        eps = h @ params["wf"] + params["bf"]
        x_recon = jnp.clip(
            buffers["sqrt_recip_alphas_cumprod"][i] * x
            - buffers["sqrt_recipm1_alphas_cumprod"][i] * eps, -1.0, 1.0)
        mean = (buffers["posterior_mean_coef1"][i] * x_recon
                + buffers["posterior_mean_coef2"][i] * x)
        nonzero = 0.0 if i == 0 else 1.0
        std = jnp.exp(0.5 * buffers["posterior_log_variance_clipped"][i])
        x = mean + nonzero * noise_ratio * std * zx[i]
    return jnp.clip(x, -1.0, 1.0)


# ----------------------------------- main -------------------------------------
if __name__ == "__main__":
    key = jax.random.PRNGKey(0)
    kp, ks, kloop = jax.random.split(key, 3)

    params = init_params(kp)
    buffers = make_buffers(N_TIMESTEPS)
    wm, wo = pack_params(params)                         # one-time weight packing

    B = BS * N_AGENTS                                    # agent_inputs batch
    state = jax.random.normal(ks, (B, INPUT_SHAPE), jnp.float32)
    hid_s = jnp.zeros((B, RNN_HIDDEN), jnp.float32)

    action, ret = diffusion_mac_forward(state, hid_s, buffers, wm, wo, kloop,
                                        eval_mode=False)
    jax.block_until_ready(action)

    assert action.shape == (B, ACTION_DIM)
    assert ret["hidden_state"].shape == (B, RNN_HIDDEN)
    assert bool(jnp.all(jnp.isfinite(action)))

    # Correctness vs pure-JAX reference (same RNG draws, same schedule).
    ref = reference_forward(state, params, buffers, kloop, eval_mode=False)
    err = float(jnp.max(jnp.abs(action - ref)))
    assert err < 5e-2, f"kernel/reference mismatch: max |diff| = {err}"

    print("KERNEL_OK")
</pallas_src>

<mosaic_0001>
module attributes {stable_mosaic.version = 11 : i64} {
  func.func @diffusion_sample_kernel(%arg0: memref<40xf32, #tpu.memory_space<smem>>, %arg1: memref<6x4x6xf32, #tpu.memory_space<vmem>>, %arg2: memref<4x8xf32, #tpu.memory_space<vmem>>, %arg3: memref<160x64xf32, #tpu.memory_space<vmem>>, %arg4: memref<72x6xf32, #tpu.memory_space<vmem>>, %arg5: memref<4x6xf32, #tpu.memory_space<vmem>>) attributes {dimension_semantics = [], scalar_prefetch = 0 : i64, scratch_operands = 0 : i64, tpu.core_type = #tpu.core_type<tc>} {
    %c5 = arith.constant 5 : index
    %c0 = arith.constant 0 : index
    %c0_0 = arith.constant 0 : index
    %0 = vector.load %arg1[%c5, %c0, %c0_0] : memref<6x4x6xf32, #tpu.memory_space<vmem>>, vector<1x4x6xf32>
    %1 = vector.shape_cast %0 : vector<1x4x6xf32> to vector<4x6xf32>
    %c0_1 = arith.constant 0 : index
    %c0_2 = arith.constant 0 : index
    %2 = vector.load %arg3[%c0_1, %c0_2] : memref<160x64xf32, #tpu.memory_space<vmem>>, vector<64x64xf32>
    %c64 = arith.constant 64 : index
    %c0_3 = arith.constant 0 : index
    %3 = vector.load %arg3[%c64, %c0_3] : memref<160x64xf32, #tpu.memory_space<vmem>>, vector<64x64xf32>
    %c128 = arith.constant 128 : index
    %c0_4 = arith.constant 0 : index
    %4 = vector.load %arg3[%c128, %c0_4] : memref<160x64xf32, #tpu.memory_space<vmem>>, vector<8x64xf32>
    %5 = vector.extract_strided_slice %4 {offsets = [0, 0], sizes = [1, 64], strides = [1, 1]} : vector<8x64xf32> to vector<1x64xf32>
    %6 = vector.extract_strided_slice %4 {offsets = [1, 0], sizes = [1, 64], strides = [1, 1]} : vector<8x64xf32> to vector<1x64xf32>
    %c136 = arith.constant 136 : index
    %c0_5 = arith.constant 0 : index
    %7 = vector.load %arg3[%c136, %c0_5] : memref<160x64xf32, #tpu.memory_space<vmem>>, vector<6x64xf32>
    %c144 = arith.constant 144 : index
    %c0_6 = arith.constant 0 : index
    %8 = vector.load %arg3[%c144, %c0_6] : memref<160x64xf32, #tpu.memory_space<vmem>>, vector<8x64xf32>
    %c152 = arith.constant 152 : index
    %c0_7 = arith.constant 0 : index
    %9 = vector.load %arg3[%c152, %c0_7] : memref<160x64xf32, #tpu.memory_space<vmem>>, vector<5x64xf32>
    %c0_8 = arith.constant 0 : index
    %c0_9 = arith.constant 0 : index
    %10 = vector.load %arg4[%c0_8, %c0_9] : memref<72x6xf32, #tpu.memory_space<vmem>>, vector<64x6xf32>
    %c64_10 = arith.constant 64 : index
    %c0_11 = arith.constant 0 : index
    %11 = vector.load %arg4[%c64_10, %c0_11] : memref<72x6xf32, #tpu.memory_space<vmem>>, vector<1x6xf32>
    %c0_12 = arith.constant 0 : index
    %c0_13 = arith.constant 0 : index
    %12 = vector.load %arg2[%c0_12, %c0_13] : memref<4x8xf32, #tpu.memory_space<vmem>>, vector<4x8xf32>
    %cst = arith.constant dense<0.000000e+00> : vector<4x64xf32>
    %13 = tpu.matmul %12, %8, %cst {dimension_numbers = #tpu.dot_dimension_numbers<[1], [0], [0], [1], [0, 0, 1, 1], [], []>} : vector<4x8xf32>, vector<8x64xf32>, vector<4x64xf32> -> vector<4x64xf32>
    %cst_14 = arith.constant dense<0.000000e+00> : vector<4x64xf32>
    %14 = tpu.matmul %1, %7, %cst_14 {dimension_numbers = #tpu.dot_dimension_numbers<[1], [0], [0], [1], [0, 0, 1, 1], [], []>} : vector<4x6xf32>, vector<6x64xf32>, vector<4x64xf32> -> vector<4x64xf32>
    %15 = arith.addf %14, %13 : vector<4x64xf32>
    %16 = vector.extract_strided_slice %9 {offsets = [4, 0], sizes = [1, 64], strides = [1, 1]} : vector<5x64xf32> to vector<1x64xf32>
    %17 = vector.broadcast %16 : vector<1x64xf32> to vector<4x64xf32>
    %18 = arith.addf %15, %17 : vector<4x64xf32>
    %cst_15 = arith.constant 2.000000e+01 : f32
    %19 = vector.broadcast %cst_15 : f32 to vector<4x64xf32>
    %20 = arith.minimumf %18, %19 : vector<4x64xf32>
    %21 = math.exp %20 : vector<4x64xf32>
    %cst_16 = arith.constant 1.000000e+00 : f32
    %22 = vector.broadcast %cst_16 : f32 to vector<4x64xf32>
    %23 = arith.addf %22, %21 : vector<4x64xf32>
    %cst_17 = arith.constant 1.000000e+00 : f32
    %24 = vector.broadcast %cst_17 : f32 to vector<4x64xf32>
    %25 = arith.addf %24, %21 : vector<4x64xf32>
    %26 = arith.mulf %23, %25 : vector<4x64xf32>
    %cst_18 = arith.constant 1.000000e+00 : f32
    %27 = vector.broadcast %cst_18 : f32 to vector<4x64xf32>
    %28 = arith.subf %26, %27 : vector<4x64xf32>
    %29 = arith.mulf %18, %28 : vector<4x64xf32>
    %cst_19 = arith.constant 1.000000e+00 : f32
    %30 = vector.broadcast %cst_19 : f32 to vector<4x64xf32>
    %31 = arith.addf %26, %30 : vector<4x64xf32>
    %32 = tpu.reciprocal %31 {approx = true} : vector<4x64xf32> -> vector<4x64xf32>
    %33 = arith.mulf %29, %32 : vector<4x64xf32>
    %cst_20 = arith.constant dense<0.000000e+00> : vector<4x64xf32>
    %34 = tpu.matmul %33, %2, %cst_20 {dimension_numbers = #tpu.dot_dimension_numbers<[1], [0], [0], [1], [0, 0, 1, 1], [], []>} : vector<4x64xf32>, vector<64x64xf32>, vector<4x64xf32> -> vector<4x64xf32>
    %35 = vector.broadcast %5 : vector<1x64xf32> to vector<4x64xf32>
    %36 = arith.addf %34, %35 : vector<4x64xf32>
    %cst_21 = arith.constant 2.000000e+01 : f32
    %37 = vector.broadcast %cst_21 : f32 to vector<4x64xf32>
    %38 = arith.minimumf %36, %37 : vector<4x64xf32>
    %39 = math.exp %38 : vector<4x64xf32>
    %cst_22 = arith.constant 1.000000e+00 : f32
    %40 = vector.broadcast %cst_22 : f32 to vector<4x64xf32>
    %41 = arith.addf %40, %39 : vector<4x64xf32>
    %cst_23 = arith.constant 1.000000e+00 : f32
    %42 = vector.broadcast %cst_23 : f32 to vector<4x64xf32>
    %43 = arith.addf %42, %39 : vector<4x64xf32>
    %44 = arith.mulf %41, %43 : vector<4x64xf32>
    %cst_24 = arith.constant 1.000000e+00 : f32
    %45 = vector.broadcast %cst_24 : f32 to vector<4x64xf32>
    %46 = arith.subf %44, %45 : vector<4x64xf32>
    %47 = arith.mulf %36, %46 : vector<4x64xf32>
    %cst_25 = arith.constant 1.000000e+00 : f32
    %48 = vector.broadcast %cst_25 : f32 to vector<4x64xf32>
    %49 = arith.addf %44, %48 : vector<4x64xf32>
    %50 = tpu.reciprocal %49 {approx = true} : vector<4x64xf32> -> vector<4x64xf32>
    %51 = arith.mulf %47, %50 : vector<4x64xf32>
    %cst_26 = arith.constant dense<0.000000e+00> : vector<4x64xf32>
    %52 = tpu.matmul %51, %3, %cst_26 {dimension_numbers = #tpu.dot_dimension_numbers<[1], [0], [0], [1], [0, 0, 1, 1], [], []>} : vector<4x64xf32>, vector<64x64xf32>, vector<4x64xf32> -> vector<4x64xf32>
    %53 = vector.broadcast %6 : vector<1x64xf32> to vector<4x64xf32>
    %54 = arith.addf %52, %53 : vector<4x64xf32>
    %cst_27 = arith.constant 2.000000e+01 : f32
    %55 = vector.broadcast %cst_27 : f32 to vector<4x64xf32>
    %56 = arith.minimumf %54, %55 : vector<4x64xf32>
    %57 = math.exp %56 : vector<4x64xf32>
    %cst_28 = arith.constant 1.000000e+00 : f32
    %58 = vector.broadcast %cst_28 : f32 to vector<4x64xf32>
    %59 = arith.addf %58, %57 : vector<4x64xf32>
    %cst_29 = arith.constant 1.000000e+00 : f32
    %60 = vector.broadcast %cst_29 : f32 to vector<4x64xf32>
    %61 = arith.addf %60, %57 : vector<4x64xf32>
    %62 = arith.mulf %59, %61 : vector<4x64xf32>
    %cst_30 = arith.constant 1.000000e+00 : f32
    %63 = vector.broadcast %cst_30 : f32 to vector<4x64xf32>
    %64 = arith.subf %62, %63 : vector<4x64xf32>
    %65 = arith.mulf %54, %64 : vector<4x64xf32>
    %cst_31 = arith.constant 1.000000e+00 : f32
    %66 = vector.broadcast %cst_31 : f32 to vector<4x64xf32>
    %67 = arith.addf %62, %66 : vector<4x64xf32>
    %68 = tpu.reciprocal %67 {approx = true} : vector<4x64xf32> -> vector<4x64xf32>
    %69 = arith.mulf %65, %68 : vector<4x64xf32>
    %cst_32 = arith.constant dense<0.000000e+00> : vector<4x6xf32>
    %70 = tpu.matmul %69, %10, %cst_32 {dimension_numbers = #tpu.dot_dimension_numbers<[1], [0], [0], [1], [0, 0, 1, 1], [], []>} : vector<4x64xf32>, vector<64x6xf32>, vector<4x6xf32> -> vector<4x6xf32>
    %71 = vector.broadcast %11 : vector<1x6xf32> to vector<4x6xf32>
    %72 = arith.addf %70, %71 : vector<4x6xf32>
    %c32 = arith.constant 32 : index
    %73 = memref.load %arg0[%c32] : memref<40xf32, #tpu.memory_space<smem>>
    %c33 = arith.constant 33 : index
    %74 = memref.load %arg0[%c33] : memref<40xf32, #tpu.memory_space<smem>>
    %c34 = arith.constant 34 : index
    %75 = memref.load %arg0[%c34] : memref<40xf32, #tpu.memory_space<smem>>
    %c35 = arith.constant 35 : index
    %76 = memref.load %arg0[%c35] : memref<40xf32, #tpu.memory_space<smem>>
    %c36 = arith.constant 36 : index
    %77 = memref.load %arg0[%c36] : memref<40xf32, #tpu.memory_space<smem>>
    %78 = vector.broadcast %73 : f32 to vector<4x6xf32>
    %79 = arith.mulf %78, %1 : vector<4x6xf32>
    %80 = vector.broadcast %74 : f32 to vector<4x6xf32>
    %81 = arith.mulf %80, %72 : vector<4x6xf32>
    %82 = arith.subf %79, %81 : vector<4x6xf32>
    %cst_33 = arith.constant -1.000000e+00 : f32
    %cst_34 = arith.constant 1.000000e+00 : f32
    %83 = vector.broadcast %cst_33 : f32 to vector<4x6xf32>
    %84 = arith.maximumf %83, %82 : vector<4x6xf32>
    %85 = vector.broadcast %cst_34 : f32 to vector<4x6xf32>
    %86 = arith.minimumf %85, %84 : vector<4x6xf32>
    %87 = vector.broadcast %75 : f32 to vector<4x6xf32>
    %88 = arith.mulf %87, %86 : vector<4x6xf32>
    %89 = vector.broadcast %76 : f32 to vector<4x6xf32>
    %90 = arith.mulf %89, %1 : vector<4x6xf32>
    %91 = arith.addf %88, %90 : vector<4x6xf32>
    %c4 = arith.constant 4 : index
    %c0_35 = arith.constant 0 : index
    %c0_36 = arith.constant 0 : index
    %92 = vector.load %arg1[%c4, %c0_35, %c0_36] : memref<6x4x6xf32, #tpu.memory_space<vmem>>, vector<1x4x6xf32>
    %93 = vector.shape_cast %92 : vector<1x4x6xf32> to vector<4x6xf32>
    %94 = vector.broadcast %77 : f32 to vector<4x6xf32>
    %95 = arith.mulf %94, %93 : vector<4x6xf32>
    %96 = arith.addf %91, %95 : vector<4x6xf32>
    %cst_37 = arith.constant dense<0.000000e+00> : vector<4x64xf32>
    %97 = tpu.matmul %96, %7, %cst_37 {dimension_numbers = #tpu.dot_dimension_numbers<[1], [0], [0], [1], [0, 0, 1, 1], [], []>} : vector<4x6xf32>, vector<6x64xf32>, vector<4x64xf32> -> vector<4x64xf32>
    %98 = arith.addf %97, %13 : vector<4x64xf32>
    %99 = vector.extract_strided_slice %9 {offsets = [3, 0], sizes = [1, 64], strides = [1, 1]} : vector<5x64xf32> to vector<1x64xf32>
    %100 = vector.broadcast %99 : vector<1x64xf32> to vector<4x64xf32>
    %101 = arith.addf %98, %100 : vector<4x64xf32>
    %cst_38 = arith.constant 2.000000e+01 : f32
    %102 = vector.broadcast %cst_38 : f32 to vector<4x64xf32>
    %103 = arith.minimumf %101, %102 : vector<4x64xf32>
    %104 = math.exp %103 : vector<4x64xf32>
    %cst_39 = arith.constant 1.000000e+00 : f32
    %105 = vector.broadcast %cst_39 : f32 to vector<4x64xf32>
    %106 = arith.addf %105, %104 : vector<4x64xf32>
    %cst_40 = arith.constant 1.000000e+00 : f32
    %107 = vector.broadcast %cst_40 : f32 to vector<4x64xf32>
    %108 = arith.addf %107, %104 : vector<4x64xf32>
    %109 = arith.mulf %106, %108 : vector<4x64xf32>
    %cst_41 = arith.constant 1.000000e+00 : f32
    %110 = vector.broadcast %cst_41 : f32 to vector<4x64xf32>
    %111 = arith.subf %109, %110 : vector<4x64xf32>
    %112 = arith.mulf %101, %111 : vector<4x64xf32>
    %cst_42 = arith.constant 1.000000e+00 : f32
    %113 = vector.broadcast %cst_42 : f32 to vector<4x64xf32>
    %114 = arith.addf %109, %113 : vector<4x64xf32>
    %115 = tpu.reciprocal %114 {approx = true} : vector<4x64xf32> -> vector<4x64xf32>
    %116 = arith.mulf %112, %115 : vector<4x64xf32>
    %cst_43 = arith.constant dense<0.000000e+00> : vector<4x64xf32>
    %117 = tpu.matmul %116, %2, %cst_43 {dimension_numbers = #tpu.dot_dimension_numbers<[1], [0], [0], [1], [0, 0, 1, 1], [], []>} : vector<4x64xf32>, vector<64x64xf32>, vector<4x64xf32> -> vector<4x64xf32>
    %118 = vector.broadcast %5 : vector<1x64xf32> to vector<4x64xf32>
    %119 = arith.addf %117, %118 : vector<4x64xf32>
    %cst_44 = arith.constant 2.000000e+01 : f32
    %120 = vector.broadcast %cst_44 : f32 to vector<4x64xf32>
    %121 = arith.minimumf %119, %120 : vector<4x64xf32>
    %122 = math.exp %121 : vector<4x64xf32>
    %cst_45 = arith.constant 1.000000e+00 : f32
    %123 = vector.broadcast %cst_45 : f32 to vector<4x64xf32>
    %124 = arith.addf %123, %122 : vector<4x64xf32>
    %cst_46 = arith.constant 1.000000e+00 : f32
    %125 = vector.broadcast %cst_46 : f32 to vector<4x64xf32>
    %126 = arith.addf %125, %122 : vector<4x64xf32>
    %127 = arith.mulf %124, %126 : vector<4x64xf32>
    %cst_47 = arith.constant 1.000000e+00 : f32
    %128 = vector.broadcast %cst_47 : f32 to vector<4x64xf32>
    %129 = arith.subf %127, %128 : vector<4x64xf32>
    %130 = arith.mulf %119, %129 : vector<4x64xf32>
    %cst_48 = arith.constant 1.000000e+00 : f32
    %131 = vector.broadcast %cst_48 : f32 to vector<4x64xf32>
    %132 = arith.addf %127, %131 : vector<4x64xf32>
    %133 = tpu.reciprocal %132 {approx = true} : vector<4x64xf32> -> vector<4x64xf32>
    %134 = arith.mulf %130, %133 : vector<4x64xf32>
    %cst_49 = arith.constant dense<0.000000e+00> : vector<4x64xf32>
    %135 = tpu.matmul %134, %3, %cst_49 {dimension_numbers = #tpu.dot_dimension_numbers<[1], [0], [0], [1], [0, 0, 1, 1], [], []>} : vector<4x64xf32>, vector<64x64xf32>, vector<4x64xf32> -> vector<4x64xf32>
    %136 = vector.broadcast %6 : vector<1x64xf32> to vector<4x64xf32>
    %137 = arith.addf %135, %136 : vector<4x64xf32>
    %cst_50 = arith.constant 2.000000e+01 : f32
    %138 = vector.broadcast %cst_50 : f32 to vector<4x64xf32>
    %139 = arith.minimumf %137, %138 : vector<4x64xf32>
    %140 = math.exp %139 : vector<4x64xf32>
    %cst_51 = arith.constant 1.000000e+00 : f32
    %141 = vector.broadcast %cst_51 : f32 to vector<4x64xf32>
    %142 = arith.addf %141, %140 : vector<4x64xf32>
    %cst_52 = arith.constant 1.000000e+00 : f32
    %143 = vector.broadcast %cst_52 : f32 to vector<4x64xf32>
    %144 = arith.addf %143, %140 : vector<4x64xf32>
    %145 = arith.mulf %142, %144 : vector<4x64xf32>
    %cst_53 = arith.constant 1.000000e+00 : f32
    %146 = vector.broadcast %cst_53 : f32 to vector<4x64xf32>
    %147 = arith.subf %145, %146 : vector<4x64xf32>
    %148 = arith.mulf %137, %147 : vector<4x64xf32>
    %cst_54 = arith.constant 1.000000e+00 : f32
    %149 = vector.broadcast %cst_54 : f32 to vector<4x64xf32>
    %150 = arith.addf %145, %149 : vector<4x64xf32>
    %151 = tpu.reciprocal %150 {approx = true} : vector<4x64xf32> -> vector<4x64xf32>
    %152 = arith.mulf %148, %151 : vector<4x64xf32>
    %cst_55 = arith.constant dense<0.000000e+00> : vector<4x6xf32>
    %153 = tpu.matmul %152, %10, %cst_55 {dimension_numbers = #tpu.dot_dimension_numbers<[1], [0], [0], [1], [0, 0, 1, 1], [], []>} : vector<4x64xf32>, vector<64x6xf32>, vector<4x6xf32> -> vector<4x6xf32>
    %154 = vector.broadcast %11 : vector<1x6xf32> to vector<4x6xf32>
    %155 = arith.addf %153, %154 : vector<4x6xf32>
    %c24 = arith.constant 24 : index
    %156 = memref.load %arg0[%c24] : memref<40xf32, #tpu.memory_space<smem>>
    %c25 = arith.constant 25 : index
    %157 = memref.load %arg0[%c25] : memref<40xf32, #tpu.memory_space<smem>>
    %c26 = arith.constant 26 : index
    %158 = memref.load %arg0[%c26] : memref<40xf32, #tpu.memory_space<smem>>
    %c27 = arith.constant 27 : index
    %159 = memref.load %arg0[%c27] : memref<40xf32, #tpu.memory_space<smem>>
    %c28 = arith.constant 28 : index
    %160 = memref.load %arg0[%c28] : memref<40xf32, #tpu.memory_space<smem>>
    %161 = vector.broadcast %156 : f32 to vector<4x6xf32>
    %162 = arith.mulf %161, %96 : vector<4x6xf32>
    %163 = vector.broadcast %157 : f32 to vector<4x6xf32>
    %164 = arith.mulf %163, %155 : vector<4x6xf32>
    %165 = arith.subf %162, %164 : vector<4x6xf32>
    %cst_56 = arith.constant -1.000000e+00 : f32
    %cst_57 = arith.constant 1.000000e+00 : f32
    %166 = vector.broadcast %cst_56 : f32 to vector<4x6xf32>
    %167 = arith.maximumf %166, %165 : vector<4x6xf32>
    %168 = vector.broadcast %cst_57 : f32 to vector<4x6xf32>
    %169 = arith.minimumf %168, %167 : vector<4x6xf32>
    %170 = vector.broadcast %158 : f32 to vector<4x6xf32>
    %171 = arith.mulf %170, %169 : vector<4x6xf32>
    %172 = vector.broadcast %159 : f32 to vector<4x6xf32>
    %173 = arith.mulf %172, %96 : vector<4x6xf32>
    %174 = arith.addf %171, %173 : vector<4x6xf32>
    %c3 = arith.constant 3 : index
    %c0_58 = arith.constant 0 : index
    %c0_59 = arith.constant 0 : index
    %175 = vector.load %arg1[%c3, %c0_58, %c0_59] : memref<6x4x6xf32, #tpu.memory_space<vmem>>, vector<1x4x6xf32>
    %176 = vector.shape_cast %175 : vector<1x4x6xf32> to vector<4x6xf32>
    %177 = vector.broadcast %160 : f32 to vector<4x6xf32>
    %178 = arith.mulf %177, %176 : vector<4x6xf32>
    %179 = arith.addf %174, %178 : vector<4x6xf32>
    %cst_60 = arith.constant dense<0.000000e+00> : vector<4x64xf32>
    %180 = tpu.matmul %179, %7, %cst_60 {dimension_numbers = #tpu.dot_dimension_numbers<[1], [0], [0], [1], [0, 0, 1, 1], [], []>} : vector<4x6xf32>, vector<6x64xf32>, vector<4x64xf32> -> vector<4x64xf32>
    %181 = arith.addf %180, %13 : vector<4x64xf32>
    %182 = vector.extract_strided_slice %9 {offsets = [2, 0], sizes = [1, 64], strides = [1, 1]} : vector<5x64xf32> to vector<1x64xf32>
    %183 = vector.broadcast %182 : vector<1x64xf32> to vector<4x64xf32>
    %184 = arith.addf %181, %183 : vector<4x64xf32>
    %cst_61 = arith.constant 2.000000e+01 : f32
    %185 = vector.broadcast %cst_61 : f32 to vector<4x64xf32>
    %186 = arith.minimumf %184, %185 : vector<4x64xf32>
    %187 = math.exp %186 : vector<4x64xf32>
    %cst_62 = arith.constant 1.000000e+00 : f32
    %188 = vector.broadcast %cst_62 : f32 to vector<4x64xf32>
    %189 = arith.addf %188, %187 : vector<4x64xf32>
    %cst_63 = arith.constant 1.000000e+00 : f32
    %190 = vector.broadcast %cst_63 : f32 to vector<4x64xf32>
    %191 = arith.addf %190, %187 : vector<4x64xf32>
    %192 = arith.mulf %189, %191 : vector<4x64xf32>
    %cst_64 = arith.constant 1.000000e+00 : f32
    %193 = vector.broadcast %cst_64 : f32 to vector<4x64xf32>
    %194 = arith.subf %192, %193 : vector<4x64xf32>
    %195 = arith.mulf %184, %194 : vector<4x64xf32>
    %cst_65 = arith.constant 1.000000e+00 : f32
    %196 = vector.broadcast %cst_65 : f32 to vector<4x64xf32>
    %197 = arith.addf %192, %196 : vector<4x64xf32>
    %198 = tpu.reciprocal %197 {approx = true} : vector<4x64xf32> -> vector<4x64xf32>
    %199 = arith.mulf %195, %198 : vector<4x64xf32>
    %cst_66 = arith.constant dense<0.000000e+00> : vector<4x64xf32>
    %200 = tpu.matmul %199, %2, %cst_66 {dimension_numbers = #tpu.dot_dimension_numbers<[1], [0], [0], [1], [0, 0, 1, 1], [], []>} : vector<4x64xf32>, vector<64x64xf32>, vector<4x64xf32> -> vector<4x64xf32>
    %201 = vector.broadcast %5 : vector<1x64xf32> to vector<4x64xf32>
    %202 = arith.addf %200, %201 : vector<4x64xf32>
    %cst_67 = arith.constant 2.000000e+01 : f32
    %203 = vector.broadcast %cst_67 : f32 to vector<4x64xf32>
    %204 = arith.minimumf %202, %203 : vector<4x64xf32>
    %205 = math.exp %204 : vector<4x64xf32>
    %cst_68 = arith.constant 1.000000e+00 : f32
    %206 = vector.broadcast %cst_68 : f32 to vector<4x64xf32>
    %207 = arith.addf %206, %205 : vector<4x64xf32>
    %cst_69 = arith.constant 1.000000e+00 : f32
    %208 = vector.broadcast %cst_69 : f32 to vector<4x64xf32>
    %209 = arith.addf %208, %205 : vector<4x64xf32>
    %210 = arith.mulf %207, %209 : vector<4x64xf32>
    %cst_70 = arith.constant 1.000000e+00 : f32
    %211 = vector.broadcast %cst_70 : f32 to vector<4x64xf32>
    %212 = arith.subf %210, %211 : vector<4x64xf32>
    %213 = arith.mulf %202, %212 : vector<4x64xf32>
    %cst_71 = arith.constant 1.000000e+00 : f32
    %214 = vector.broadcast %cst_71 : f32 to vector<4x64xf32>
    %215 = arith.addf %210, %214 : vector<4x64xf32>
    %216 = tpu.reciprocal %215 {approx = true} : vector<4x64xf32> -> vector<4x64xf32>
    %217 = arith.mulf %213, %216 : vector<4x64xf32>
    %cst_72 = arith.constant dense<0.000000e+00> : vector<4x64xf32>
    %218 = tpu.matmul %217, %3, %cst_72 {dimension_numbers = #tpu.dot_dimension_numbers<[1], [0], [0], [1], [0, 0, 1, 1], [], []>} : vector<4x64xf32>, vector<64x64xf32>, vector<4x64xf32> -> vector<4x64xf32>
    %219 = vector.broadcast %6 : vector<1x64xf32> to vector<4x64xf32>
    %220 = arith.addf %218, %219 : vector<4x64xf32>
    %cst_73 = arith.constant 2.000000e+01 : f32
    %221 = vector.broadcast %cst_73 : f32 to vector<4x64xf32>
    %222 = arith.minimumf %220, %221 : vector<4x64xf32>
    %223 = math.exp %222 : vector<4x64xf32>
    %cst_74 = arith.constant 1.000000e+00 : f32
    %224 = vector.broadcast %cst_74 : f32 to vector<4x64xf32>
    %225 = arith.addf %224, %223 : vector<4x64xf32>
    %cst_75 = arith.constant 1.000000e+00 : f32
    %226 = vector.broadcast %cst_75 : f32 to vector<4x64xf32>
    %227 = arith.addf %226, %223 : vector<4x64xf32>
    %228 = arith.mulf %225, %227 : vector<4x64xf32>
    %cst_76 = arith.constant 1.000000e+00 : f32
    %229 = vector.broadcast %cst_76 : f32 to vector<4x64xf32>
    %230 = arith.subf %228, %229 : vector<4x64xf32>
    %231 = arith.mulf %220, %230 : vector<4x64xf32>
    %cst_77 = arith.constant 1.000000e+00 : f32
    %232 = vector.broadcast %cst_77 : f32 to vector<4x64xf32>
    %233 = arith.addf %228, %232 : vector<4x64xf32>
    %234 = tpu.reciprocal %233 {approx = true} : vector<4x64xf32> -> vector<4x64xf32>
    %235 = arith.mulf %231, %234 : vector<4x64xf32>
    %cst_78 = arith.constant dense<0.000000e+00> : vector<4x6xf32>
    %236 = tpu.matmul %235, %10, %cst_78 {dimension_numbers = #tpu.dot_dimension_numbers<[1], [0], [0], [1], [0, 0, 1, 1], [], []>} : vector<4x64xf32>, vector<64x6xf32>, vector<4x6xf32> -> vector<4x6xf32>
    %237 = vector.broadcast %11 : vector<1x6xf32> to vector<4x6xf32>
    %238 = arith.addf %236, %237 : vector<4x6xf32>
    %c16 = arith.constant 16 : index
    %239 = memref.load %arg0[%c16] : memref<40xf32, #tpu.memory_space<smem>>
    %c17 = arith.constant 17 : index
    %240 = memref.load %arg0[%c17] : memref<40xf32, #tpu.memory_space<smem>>
    %c18 = arith.constant 18 : index
    %241 = memref.load %arg0[%c18] : memref<40xf32, #tpu.memory_space<smem>>
    %c19 = arith.constant 19 : index
    %242 = memref.load %arg0[%c19] : memref<40xf32, #tpu.memory_space<smem>>
    %c20 = arith.constant 20 : index
    %243 = memref.load %arg0[%c20] : memref<40xf32, #tpu.memory_space<smem>>
    %244 = vector.broadcast %239 : f32 to vector<4x6xf32>
    %245 = arith.mulf %244, %179 : vector<4x6xf32>
    %246 = vector.broadcast %240 : f32 to vector<4x6xf32>
    %247 = arith.mulf %246, %238 : vector<4x6xf32>
    %248 = arith.subf %245, %247 : vector<4x6xf32>
    %cst_79 = arith.constant -1.000000e+00 : f32
    %cst_80 = arith.constant 1.000000e+00 : f32
    %249 = vector.broadcast %cst_79 : f32 to vector<4x6xf32>
    %250 = arith.maximumf %249, %248 : vector<4x6xf32>
    %251 = vector.broadcast %cst_80 : f32 to vector<4x6xf32>
    %252 = arith.minimumf %251, %250 : vector<4x6xf32>
    %253 = vector.broadcast %241 : f32 to vector<4x6xf32>
    %254 = arith.mulf %253, %252 : vector<4x6xf32>
    %255 = vector.broadcast %242 : f32 to vector<4x6xf32>
    %256 = arith.mulf %255, %179 : vector<4x6xf32>
    %257 = arith.addf %254, %256 : vector<4x6xf32>
    %c2 = arith.constant 2 : index
    %c0_81 = arith.constant 0 : index
    %c0_82 = arith.constant 0 : index
    %258 = vector.load %arg1[%c2, %c0_81, %c0_82] : memref<6x4x6xf32, #tpu.memory_space<vmem>>, vector<1x4x6xf32>
    %259 = vector.shape_cast %258 : vector<1x4x6xf32> to vector<4x6xf32>
    %260 = vector.broadcast %243 : f32 to vector<4x6xf32>
    %261 = arith.mulf %260, %259 : vector<4x6xf32>
    %262 = arith.addf %257, %261 : vector<4x6xf32>
    %cst_83 = arith.constant dense<0.000000e+00> : vector<4x64xf32>
    %263 = tpu.matmul %262, %7, %cst_83 {dimension_numbers = #tpu.dot_dimension_numbers<[1], [0], [0], [1], [0, 0, 1, 1], [], []>} : vector<4x6xf32>, vector<6x64xf32>, vector<4x64xf32> -> vector<4x64xf32>
    %264 = arith.addf %263, %13 : vector<4x64xf32>
    %265 = vector.extract_strided_slice %9 {offsets = [1, 0], sizes = [1, 64], strides = [1, 1]} : vector<5x64xf32> to vector<1x64xf32>
    %266 = vector.broadcast %265 : vector<1x64xf32> to vector<4x64xf32>
    %267 = arith.addf %264, %266 : vector<4x64xf32>
    %cst_84 = arith.constant 2.000000e+01 : f32
    %268 = vector.broadcast %cst_84 : f32 to vector<4x64xf32>
    %269 = arith.minimumf %267, %268 : vector<4x64xf32>
    %270 = math.exp %269 : vector<4x64xf32>
    %cst_85 = arith.constant 1.000000e+00 : f32
    %271 = vector.broadcast %cst_85 : f32 to vector<4x64xf32>
    %272 = arith.addf %271, %270 : vector<4x64xf32>
    %cst_86 = arith.constant 1.000000e+00 : f32
    %273 = vector.broadcast %cst_86 : f32 to vector<4x64xf32>
    %274 = arith.addf %273, %270 : vector<4x64xf32>
    %275 = arith.mulf %272, %274 : vector<4x64xf32>
    %cst_87 = arith.constant 1.000000e+00 : f32
    %276 = vector.broadcast %cst_87 : f32 to vector<4x64xf32>
    %277 = arith.subf %275, %276 : vector<4x64xf32>
    %278 = arith.mulf %267, %277 : vector<4x64xf32>
    %cst_88 = arith.constant 1.000000e+00 : f32
    %279 = vector.broadcast %cst_88 : f32 to vector<4x64xf32>
    %280 = arith.addf %275, %279 : vector<4x64xf32>
    %281 = tpu.reciprocal %280 {approx = true} : vector<4x64xf32> -> vector<4x64xf32>
    %282 = arith.mulf %278, %281 : vector<4x64xf32>
    %cst_89 = arith.constant dense<0.000000e+00> : vector<4x64xf32>
    %283 = tpu.matmul %282, %2, %cst_89 {dimension_numbers = #tpu.dot_dimension_numbers<[1], [0], [0], [1], [0, 0, 1, 1], [], []>} : vector<4x64xf32>, vector<64x64xf32>, vector<4x64xf32> -> vector<4x64xf32>
    %284 = vector.broadcast %5 : vector<1x64xf32> to vector<4x64xf32>
    %285 = arith.addf %283, %284 : vector<4x64xf32>
    %cst_90 = arith.constant 2.000000e+01 : f32
    %286 = vector.broadcast %cst_90 : f32 to vector<4x64xf32>
    %287 = arith.minimumf %285, %286 : vector<4x64xf32>
    %288 = math.exp %287 : vector<4x64xf32>
    %cst_91 = arith.constant 1.000000e+00 : f32
    %289 = vector.broadcast %cst_91 : f32 to vector<4x64xf32>
    %290 = arith.addf %289, %288 : vector<4x64xf32>
    %cst_92 = arith.constant 1.000000e+00 : f32
    %291 = vector.broadcast %cst_92 : f32 to vector<4x64xf32>
    %292 = arith.addf %291, %288 : vector<4x64xf32>
    %293 = arith.mulf %290, %292 : vector<4x64xf32>
    %cst_93 = arith.constant 1.000000e+00 : f32
    %294 = vector.broadcast %cst_93 : f32 to vector<4x64xf32>
    %295 = arith.subf %293, %294 : vector<4x64xf32>
    %296 = arith.mulf %285, %295 : vector<4x64xf32>
    %cst_94 = arith.constant 1.000000e+00 : f32
    %297 = vector.broadcast %cst_94 : f32 to vector<4x64xf32>
    %298 = arith.addf %293, %297 : vector<4x64xf32>
    %299 = tpu.reciprocal %298 {approx = true} : vector<4x64xf32> -> vector<4x64xf32>
    %300 = arith.mulf %296, %299 : vector<4x64xf32>
    %cst_95 = arith.constant dense<0.000000e+00> : vector<4x64xf32>
    %301 = tpu.matmul %300, %3, %cst_95 {dimension_numbers = #tpu.dot_dimension_numbers<[1], [0], [0], [1], [0, 0, 1, 1], [], []>} : vector<4x64xf32>, vector<64x64xf32>, vector<4x64xf32> -> vector<4x64xf32>
    %302 = vector.broadcast %6 : vector<1x64xf32> to vector<4x64xf32>
    %303 = arith.addf %301, %302 : vector<4x64xf32>
    %cst_96 = arith.constant 2.000000e+01 : f32
    %304 = vector.broadcast %cst_96 : f32 to vector<4x64xf32>
    %305 = arith.minimumf %303, %304 : vector<4x64xf32>
    %306 = math.exp %305 : vector<4x64xf32>
    %cst_97 = arith.constant 1.000000e+00 : f32
    %307 = vector.broadcast %cst_97 : f32 to vector<4x64xf32>
    %308 = arith.addf %307, %306 : vector<4x64xf32>
    %cst_98 = arith.constant 1.000000e+00 : f32
    %309 = vector.broadcast %cst_98 : f32 to vector<4x64xf32>
    %310 = arith.addf %309, %306 : vector<4x64xf32>
    %311 = arith.mulf %308, %310 : vector<4x64xf32>
    %cst_99 = arith.constant 1.000000e+00 : f32
    %312 = vector.broadcast %cst_99 : f32 to vector<4x64xf32>
    %313 = arith.subf %311, %312 : vector<4x64xf32>
    %314 = arith.mulf %303, %313 : vector<4x64xf32>
    %cst_100 = arith.constant 1.000000e+00 : f32
    %315 = vector.broadcast %cst_100 : f32 to vector<4x64xf32>
    %316 = arith.addf %311, %315 : vector<4x64xf32>
    %317 = tpu.reciprocal %316 {approx = true} : vector<4x64xf32> -> vector<4x64xf32>
    %318 = arith.mulf %314, %317 : vector<4x64xf32>
    %cst_101 = arith.constant dense<0.000000e+00> : vector<4x6xf32>
    %319 = tpu.matmul %318, %10, %cst_101 {dimension_numbers = #tpu.dot_dimension_numbers<[1], [0], [0], [1], [0, 0, 1, 1], [], []>} : vector<4x64xf32>, vector<64x6xf32>, vector<4x6xf32> -> vector<4x6xf32>
    %320 = vector.broadcast %11 : vector<1x6xf32> to vector<4x6xf32>
    %321 = arith.addf %319, %320 : vector<4x6xf32>
    %c8 = arith.constant 8 : index
    %322 = memref.load %arg0[%c8] : memref<40xf32, #tpu.memory_space<smem>>
    %c9 = arith.constant 9 : index
    %323 = memref.load %arg0[%c9] : memref<40xf32, #tpu.memory_space<smem>>
    %c10 = arith.constant 10 : index
    %324 = memref.load %arg0[%c10] : memref<40xf32, #tpu.memory_space<smem>>
    %c11 = arith.constant 11 : index
    %325 = memref.load %arg0[%c11] : memref<40xf32, #tpu.memory_space<smem>>
    %c12 = arith.constant 12 : index
    %326 = memref.load %arg0[%c12] : memref<40xf32, #tpu.memory_space<smem>>
    %327 = vector.broadcast %322 : f32 to vector<4x6xf32>
    %328 = arith.mulf %327, %262 : vector<4x6xf32>
    %329 = vector.broadcast %323 : f32 to vector<4x6xf32>
    %330 = arith.mulf %329, %321 : vector<4x6xf32>
    %331 = arith.subf %328, %330 : vector<4x6xf32>
    %cst_102 = arith.constant -1.000000e+00 : f32
    %cst_103 = arith.constant 1.000000e+00 : f32
    %332 = vector.broadcast %cst_102 : f32 to vector<4x6xf32>
    %333 = arith.maximumf %332, %331 : vector<4x6xf32>
    %334 = vector.broadcast %cst_103 : f32 to vector<4x6xf32>
    %335 = arith.minimumf %334, %333 : vector<4x6xf32>
    %336 = vector.broadcast %324 : f32 to vector<4x6xf32>
    %337 = arith.mulf %336, %335 : vector<4x6xf32>
    %338 = vector.broadcast %325 : f32 to vector<4x6xf32>
    %339 = arith.mulf %338, %262 : vector<4x6xf32>
    %340 = arith.addf %337, %339 : vector<4x6xf32>
    %c1 = arith.constant 1 : index
    %c0_104 = arith.constant 0 : index
    %c0_105 = arith.constant 0 : index
    %341 = vector.load %arg1[%c1, %c0_104, %c0_105] : memref<6x4x6xf32, #tpu.memory_space<vmem>>, vector<1x4x6xf32>
    %342 = vector.shape_cast %341 : vector<1x4x6xf32> to vector<4x6xf32>
    %343 = vector.broadcast %326 : f32 to vector<4x6xf32>
    %344 = arith.mulf %343, %342 : vector<4x6xf32>
    %345 = arith.addf %340, %344 : vector<4x6xf32>
    %cst_106 = arith.constant dense<0.000000e+00> : vector<4x64xf32>
    %346 = tpu.matmul %345, %7, %cst_106 {dimension_numbers = #tpu.dot_dimension_numbers<[1], [0], [0], [1], [0, 0, 1, 1], [], []>} : vector<4x6xf32>, vector<6x64xf32>, vector<4x64xf32> -> vector<4x64xf32>
    %347 = arith.addf %346, %13 : vector<4x64xf32>
    %348 = vector.extract_strided_slice %9 {offsets = [0, 0], sizes = [1, 64], strides = [1, 1]} : vector<5x64xf32> to vector<1x64xf32>
    %349 = vector.broadcast %348 : vector<1x64xf32> to vector<4x64xf32>
    %350 = arith.addf %347, %349 : vector<4x64xf32>
    %cst_107 = arith.constant 2.000000e+01 : f32
    %351 = vector.broadcast %cst_107 : f32 to vector<4x64xf32>
    %352 = arith.minimumf %350, %351 : vector<4x64xf32>
    %353 = math.exp %352 : vector<4x64xf32>
    %cst_108 = arith.constant 1.000000e+00 : f32
    %354 = vector.broadcast %cst_108 : f32 to vector<4x64xf32>
    %355 = arith.addf %354, %353 : vector<4x64xf32>
    %cst_109 = arith.constant 1.000000e+00 : f32
    %356 = vector.broadcast %cst_109 : f32 to vector<4x64xf32>
    %357 = arith.addf %356, %353 : vector<4x64xf32>
    %358 = arith.mulf %355, %357 : vector<4x64xf32>
    %cst_110 = arith.constant 1.000000e+00 : f32
    %359 = vector.broadcast %cst_110 : f32 to vector<4x64xf32>
    %360 = arith.subf %358, %359 : vector<4x64xf32>
    %361 = arith.mulf %350, %360 : vector<4x64xf32>
    %cst_111 = arith.constant 1.000000e+00 : f32
    %362 = vector.broadcast %cst_111 : f32 to vector<4x64xf32>
    %363 = arith.addf %358, %362 : vector<4x64xf32>
    %364 = tpu.reciprocal %363 {approx = true} : vector<4x64xf32> -> vector<4x64xf32>
    %365 = arith.mulf %361, %364 : vector<4x64xf32>
    %cst_112 = arith.constant dense<0.000000e+00> : vector<4x64xf32>
    %366 = tpu.matmul %365, %2, %cst_112 {dimension_numbers = #tpu.dot_dimension_numbers<[1], [0], [0], [1], [0, 0, 1, 1], [], []>} : vector<4x64xf32>, vector<64x64xf32>, vector<4x64xf32> -> vector<4x64xf32>
    %367 = vector.broadcast %5 : vector<1x64xf32> to vector<4x64xf32>
    %368 = arith.addf %366, %367 : vector<4x64xf32>
    %cst_113 = arith.constant 2.000000e+01 : f32
    %369 = vector.broadcast %cst_113 : f32 to vector<4x64xf32>
    %370 = arith.minimumf %368, %369 : vector<4x64xf32>
    %371 = math.exp %370 : vector<4x64xf32>
    %cst_114 = arith.constant 1.000000e+00 : f32
    %372 = vector.broadcast %cst_114 : f32 to vector<4x64xf32>
    %373 = arith.addf %372, %371 : vector<4x64xf32>
    %cst_115 = arith.constant 1.000000e+00 : f32
    %374 = vector.broadcast %cst_115 : f32 to vector<4x64xf32>
    %375 = arith.addf %374, %371 : vector<4x64xf32>
    %376 = arith.mulf %373, %375 : vector<4x64xf32>
    %cst_116 = arith.constant 1.000000e+00 : f32
    %377 = vector.broadcast %cst_116 : f32 to vector<4x64xf32>
    %378 = arith.subf %376, %377 : vector<4x64xf32>
    %379 = arith.mulf %368, %378 : vector<4x64xf32>
    %cst_117 = arith.constant 1.000000e+00 : f32
    %380 = vector.broadcast %cst_117 : f32 to vector<4x64xf32>
    %381 = arith.addf %376, %380 : vector<4x64xf32>
    %382 = tpu.reciprocal %381 {approx = true} : vector<4x64xf32> -> vector<4x64xf32>
    %383 = arith.mulf %379, %382 : vector<4x64xf32>
    %cst_118 = arith.constant dense<0.000000e+00> : vector<4x64xf32>
    %384 = tpu.matmul %383, %3, %cst_118 {dimension_numbers = #tpu.dot_dimension_numbers<[1], [0], [0], [1], [0, 0, 1, 1], [], []>} : vector<4x64xf32>, vector<64x64xf32>, vector<4x64xf32> -> vector<4x64xf32>
    %385 = vector.broadcast %6 : vector<1x64xf32> to vector<4x64xf32>
    %386 = arith.addf %384, %385 : vector<4x64xf32>
    %cst_119 = arith.constant 2.000000e+01 : f32
    %387 = vector.broadcast %cst_119 : f32 to vector<4x64xf32>
    %388 = arith.minimumf %386, %387 : vector<4x64xf32>
    %389 = math.exp %388 : vector<4x64xf32>
    %cst_120 = arith.constant 1.000000e+00 : f32
    %390 = vector.broadcast %cst_120 : f32 to vector<4x64xf32>
    %391 = arith.addf %390, %389 : vector<4x64xf32>
    %cst_121 = arith.constant 1.000000e+00 : f32
    %392 = vector.broadcast %cst_121 : f32 to vector<4x64xf32>
    %393 = arith.addf %392, %389 : vector<4x64xf32>
    %394 = arith.mulf %391, %393 : vector<4x64xf32>
    %cst_122 = arith.constant 1.000000e+00 : f32
    %395 = vector.broadcast %cst_122 : f32 to vector<4x64xf32>
    %396 = arith.subf %394, %395 : vector<4x64xf32>
    %397 = arith.mulf %386, %396 : vector<4x64xf32>
    %cst_123 = arith.constant 1.000000e+00 : f32
    %398 = vector.broadcast %cst_123 : f32 to vector<4x64xf32>
    %399 = arith.addf %394, %398 : vector<4x64xf32>
    %400 = tpu.reciprocal %399 {approx = true} : vector<4x64xf32> -> vector<4x64xf32>
    %401 = arith.mulf %397, %400 : vector<4x64xf32>
    %cst_124 = arith.constant dense<0.000000e+00> : vector<4x6xf32>
    %402 = tpu.matmul %401, %10, %cst_124 {dimension_numbers = #tpu.dot_dimension_numbers<[1], [0], [0], [1], [0, 0, 1, 1], [], []>} : vector<4x64xf32>, vector<64x6xf32>, vector<4x6xf32> -> vector<4x6xf32>
    %403 = vector.broadcast %11 : vector<1x6xf32> to vector<4x6xf32>
    %404 = arith.addf %402, %403 : vector<4x6xf32>
    %c0_125 = arith.constant 0 : index
    %405 = memref.load %arg0[%c0_125] : memref<40xf32, #tpu.memory_space<smem>>
    %c1_126 = arith.constant 1 : index
    %406 = memref.load %arg0[%c1_126] : memref<40xf32, #tpu.memory_space<smem>>
    %c2_127 = arith.constant 2 : index
    %407 = memref.load %arg0[%c2_127] : memref<40xf32, #tpu.memory_space<smem>>
    %c3_128 = arith.constant 3 : index
    %408 = memref.load %arg0[%c3_128] : memref<40xf32, #tpu.memory_space<smem>>
    %c4_129 = arith.constant 4 : index
    %409 = memref.load %arg0[%c4_129] : memref<40xf32, #tpu.memory_space<smem>>
    %410 = vector.broadcast %405 : f32 to vector<4x6xf32>
    %411 = arith.mulf %410, %345 : vector<4x6xf32>
    %412 = vector.broadcast %406 : f32 to vector<4x6xf32>
    %413 = arith.mulf %412, %404 : vector<4x6xf32>
    %414 = arith.subf %411, %413 : vector<4x6xf32>
    %cst_130 = arith.constant -1.000000e+00 : f32
    %cst_131 = arith.constant 1.000000e+00 : f32
    %415 = vector.broadcast %cst_130 : f32 to vector<4x6xf32>
    %416 = arith.maximumf %415, %414 : vector<4x6xf32>
    %417 = vector.broadcast %cst_131 : f32 to vector<4x6xf32>
    %418 = arith.minimumf %417, %416 : vector<4x6xf32>
    %419 = vector.broadcast %407 : f32 to vector<4x6xf32>
    %420 = arith.mulf %419, %418 : vector<4x6xf32>
    %421 = vector.broadcast %408 : f32 to vector<4x6xf32>
    %422 = arith.mulf %421, %345 : vector<4x6xf32>
    %423 = arith.addf %420, %422 : vector<4x6xf32>
    %c0_132 = arith.constant 0 : index
    %c0_133 = arith.constant 0 : index
    %c0_134 = arith.constant 0 : index
    %424 = vector.load %arg1[%c0_132, %c0_133, %c0_134] : memref<6x4x6xf32, #tpu.memory_space<vmem>>, vector<1x4x6xf32>
    %425 = vector.shape_cast %424 : vector<1x4x6xf32> to vector<4x6xf32>
    %426 = vector.broadcast %409 : f32 to vector<4x6xf32>
    %427 = arith.mulf %426, %425 : vector<4x6xf32>
    %428 = arith.addf %423, %427 : vector<4x6xf32>
    %cst_135 = arith.constant -1.000000e+00 : f32
    %cst_136 = arith.constant 1.000000e+00 : f32
    %429 = vector.broadcast %cst_135 : f32 to vector<4x6xf32>
    %430 = arith.maximumf %429, %428 : vector<4x6xf32>
    %431 = vector.broadcast %cst_136 : f32 to vector<4x6xf32>
    %432 = arith.minimumf %431, %430 : vector<4x6xf32>
    %c0_137 = arith.constant 0 : index
    %c0_138 = arith.constant 0 : index
    %433 = vector.load %arg5[%c0_137, %c0_138] : memref<4x6xf32, #tpu.memory_space<vmem>>, vector<4x6xf32>
    tpu.vector_store %arg5[%c0_137, %c0_138], %432 {strides = array<i32>} : memref<4x6xf32, #tpu.memory_space<vmem>>, vector<4x6xf32>,
    return
  }
}

</mosaic_0001>

<llo_original>
// kernel: diffusion_mac_forward.1
$region0: #{diffusion_mac_forward.1}
  #allocation0 [shape = 'u32[]', space=smem, size = 0x4, offset = 0x4, fixed_abs, tag = 'smem constant byte address 0x4 - core index']
  #allocation1 [shape = 'u32[144,128]{1,0:T(1,128)}', space=vmem, size = 0x12000, scoped, tag = 'internal scratch']
  %s0 = inlined_call_operand.vmem [shape: f32[40], index: 0, kind: input, shape index: {}]
  %s1 = inlined_call_operand.vmem [shape: f32[6,4,6], index: 1, kind: input, shape index: {}]
  %s2 = inlined_call_operand.vmem [shape: f32[4,8], index: 2, kind: input, shape index: {}]
  %s3 = inlined_call_operand.vmem [shape: f32[160,64], index: 3, kind: input, shape index: {}]
  %s4 = inlined_call_operand.vmem [shape: f32[72,6], index: 4, kind: input, shape index: {}]
  %s5 = inlined_call_operand.hbm [shape: f32[4,6], index: 5, kind: output, shape index: {}]
  %s6 = sld [smem:[#allocation0]]
  $region34: #{diffusion_mac_forward.1} parent=0
    _
  %s8 = ssub.s32 1, %s6
  %s9 = scalar_select 0, %s8, %s6
  $region1: #{diffusion_mac_forward.1} parent=0
    #allocation2 [shape = 'u8[512]{0}', space=smem, size = 0x200, scoped, tag = 'input window, operand 0, single buffered']
    #allocation3 [shape = 's32[1]{0}', space=sflag, size = 0x4, scoped, tag = 'scoped memory for diffusion_mac_forward.1']
    #allocation4 [shape = 's32[1]{0}', space=sflag, size = 0x4, scoped, tag = 'scoped memory for diffusion_mac_forward.1']
    #allocation5 [shape = 'u8[2048]{0}', space=vmem, size = 0x800, scoped, tag = 'output window, operand 0, single buffered']
    %10 = vsyncpa [#allocation4], 0
    %11 = vsyncpa [#allocation3], 0
    // Predicated region
    $region2: #{diffusion_mac_forward.1} parent=1 // pred_check
      _
    $region3: #{diffusion_mac_forward.1} parent=1 // pred_check_branch
      %13 = sbr.rel (0) target = $region5
    $region4: #{diffusion_mac_forward.1} parent=1 // pred_region
      %s15 = ssub.s32 16, 16
      %16 = vsyncadd [#allocation4], %s15
      %s18 = sshll.u32 %s0, 4
      %s19 = int_to_ptr.vmem [resolvable:$true] %s18
      %21 = dma.vmem_to_smem %s19, 16, [#allocation2], [#allocation4]
    $region5: #{diffusion_mac_forward.1} parent=1 // pred_fallthru
      _
    // Predicated region
    $region6: #{diffusion_mac_forward.1} parent=1 // pred_check
      _
    $region7: #{diffusion_mac_forward.1} parent=1 // pred_check_branch
      %23 = sbr.rel (0) target = $region9
    $region8: #{diffusion_mac_forward.1} parent=1 // pred_region
      _
    $region9: #{diffusion_mac_forward.1} parent=1 // pred_fallthru
      _
    // Predicated region
    $region10: #{diffusion_mac_forward.1} parent=1 // pred_check
      _
    $region11: #{diffusion_mac_forward.1} parent=1 // pred_check_branch
      %25 = sbr.rel (0) target = $region13
    $region12: #{diffusion_mac_forward.1} parent=1 // pred_region
      _
    $region13: #{diffusion_mac_forward.1} parent=1 // pred_fallthru
      _
    // Predicated region
    $region14: #{diffusion_mac_forward.1} parent=1 // pred_check
      _
    $region15: #{diffusion_mac_forward.1} parent=1 // pred_check_branch
      %27 = sbr.rel (0) target = $region17
    $region16: #{diffusion_mac_forward.1} parent=1 // pred_region
      _
    $region17: #{diffusion_mac_forward.1} parent=1 // pred_fallthru
      _
    // Predicated region
    $region18: #{diffusion_mac_forward.1} parent=1 // pred_check
      _
    $region19: #{diffusion_mac_forward.1} parent=1 // pred_check_branch
      %29 = sbr.rel (0) target = $region21
    $region20: #{diffusion_mac_forward.1} parent=1 // pred_region
      _
    $region21: #{diffusion_mac_forward.1} parent=1 // pred_fallthru
      _
    // Predicated region
    $region22: #{diffusion_mac_forward.1} parent=1 // pred_check
      _
    $region23: #{diffusion_mac_forward.1} parent=1 // pred_check_branch
      %31 = sbr.rel (0) target = $region25
    $region24: #{diffusion_mac_forward.1} parent=1 // pred_region
      %32 = dma.done [#allocation4], 16
    $region25: #{diffusion_mac_forward.1} parent=1 // pred_fallthru
      _
    %33 = sfence
    %s34 = scalar_lea.vmem %s1, 20
    %v35 = vld [vmem:[%s34] sm:$0xf]
    %v36 = vld [vmem:[%s3] sm:$0xff]
    %v37 = vld [vmem:[%s3 + $0x8] sm:$0xff]
    %v38 = vld [vmem:[%s3 + $0x10] sm:$0xff]
    %v39 = vld [vmem:[%s3 + $0x18] sm:$0xff]
    %v40 = vld [vmem:[%s3 + $0x20] sm:$0xff]
    %v41 = vld [vmem:[%s3 + $0x28] sm:$0xff]
    %v42 = vld [vmem:[%s3 + $0x30] sm:$0xff]
    %v43 = vld [vmem:[%s3 + $0x38] sm:$0xff]
    %v44 = vld [vmem:[%s3 + $0x40] sm:$0xff]
    %v45 = vld [vmem:[%s3 + $0x48] sm:$0xff]
    %v46 = vld [vmem:[%s3 + $0x50] sm:$0xff]
    %v47 = vld [vmem:[%s3 + $0x58] sm:$0xff]
    %v48 = vld [vmem:[%s3 + $0x60] sm:$0xff]
    %v49 = vld [vmem:[%s3 + $0x68] sm:$0xff]
    %v50 = vld [vmem:[%s3 + $0x70] sm:$0xff]
    %v51 = vld [vmem:[%s3 + $0x78] sm:$0xff]
    %v52 = vld [vmem:[%s3 + $0x80] sm:$0xff]
    %v53 = vld [vmem:[%s3 + $0x88] sm:$0x3f]
    %v54 = vld [vmem:[%s3 + $0x90] sm:$0xff]
    %v55 = vld [vmem:[%s3 + $0x98] sm:$0x1f]
    %v56 = vld [vmem:[%s4] sm:$0xff]
    %v57 = vld [vmem:[%s4 + $0x8] sm:$0xff]
    %v58 = vld [vmem:[%s4 + $0x10] sm:$0xff]
    %v59 = vld [vmem:[%s4 + $0x18] sm:$0xff]
    %v60 = vld [vmem:[%s4 + $0x20] sm:$0xff]
    %v61 = vld [vmem:[%s4 + $0x28] sm:$0xff]
    %v62 = vld [vmem:[%s4 + $0x30] sm:$0xff]
    %v63 = vld [vmem:[%s4 + $0x38] sm:$0xff]
    %v64 = vld [vmem:[%s4 + $0x40] sm:$0x1]
    %v65 = vld [vmem:[%s2] sm:$0xf]
    %vm66 = vcmask 64512
    %v68 = vsel %vm66, %v65, 0
    %70 = vmatprep.subr.mxu0 0.0
    %71 = vmatpush1.msra.mxu0 0.0
    %72 = vmatprep.subr.mxu0 0.0
    %73 = vmatpush1.msra.mxu0 0.0
    %74 = vmatprep.subr.mxu0 0.0
    %75 = vmatpush1.msra.mxu0 0.0
    %76 = vmatprep.subr.mxu0 0.0
    %77 = vmatpush1.msra.mxu0 0.0
    %78 = vmatprep.subr.mxu0 0.0
    %79 = vmatpush1.msra.mxu0 0.0
    %80 = vmatprep.subr.mxu0 0.0
    %81 = vmatpush1.msra.mxu0 0.0
    %82 = vmatprep.subr.mxu0 0.0
    %83 = vmatpush1.msra.mxu0 0.0
    %84 = vmatprep.subr.mxu0 0.0
    %85 = vmatpush1.msra.mxu0 0.0
    %86 = vmatprep.subr.mxu0 0.0
    %87 = vmatpush1.msra.mxu0 0.0
    %88 = vmatprep.subr.mxu0 0.0
    %89 = vmatpush1.msra.mxu0 0.0
    %90 = vmatprep.subr.mxu0 0.0
    %91 = vmatpush1.msra.mxu0 0.0
    %92 = vmatprep.subr.mxu0 0.0
    %93 = vmatpush1.msra.mxu0 0.0
    %94 = vmatprep.subr.mxu0 0.0
    %95 = vmatpush1.msra.mxu0 0.0
    %96 = vmatprep.subr.mxu0 0.0
    %97 = vmatpush1.msra.mxu0 0.0
    %98 = vmatprep.subr.mxu0 0.0
    %99 = vmatpush1.msra.mxu0 0.0
    %100 = vmatprep.subr.mxu0 0.0
    %101 = vmatpush1.msra.mxu0 %v54
    %102 = vmatprep.subr.mxu0 0.0
    %103 = vmatpush2.msra.mxu0 0.0
    %104 = vmatprep.subr.mxu0 0.0
    %105 = vmatpush2.msra.mxu0 0.0
    %106 = vmatprep.subr.mxu0 0.0
    %107 = vmatpush2.msra.mxu0 0.0
    %108 = vmatprep.subr.mxu0 0.0
    %109 = vmatpush2.msra.mxu0 0.0
    %110 = vmatprep.subr.mxu0 0.0
    %111 = vmatpush2.msra.mxu0 0.0
    %112 = vmatprep.subr.mxu0 0.0
    %113 = vmatpush2.msra.mxu0 0.0
    %114 = vmatprep.subr.mxu0 0.0
    %115 = vmatpush2.msra.mxu0 0.0
    %116 = vmatprep.subr.mxu0 0.0
    %117 = vmatpush2.msra.mxu0 0.0
    %118 = vmatprep.subr.mxu0 0.0
    %119 = vmatpush2.msra.mxu0 0.0
    %120 = vmatprep.subr.mxu0 0.0
    %121 = vmatpush2.msra.mxu0 0.0
    %122 = vmatprep.subr.mxu0 0.0
    %123 = vmatpush2.msra.mxu0 0.0
    %124 = vmatprep.subr.mxu0 0.0
    %125 = vmatpush2.msra.mxu0 0.0
    %126 = vmatprep.subr.mxu0 0.0
    %127 = vmatpush2.msra.mxu0 0.0
    %128 = vmatprep.subr.mxu0 0.0
    %129 = vmatpush2.msra.mxu0 0.0
    %130 = vmatprep.subr.mxu0 0.0
    %131 = vmatpush2.msra.mxu0 0.0
    %132 = vmatprep.subr.mxu0 0.0
    %133 = vmatpush2.msra.mxu0 0.0
    %134 = vmatprep.mubr.f32.mxu0 0.0
    %135 = vmatmul.mubr.f32.gmra.mxu0 %v68
    %v136 = vpop.f32.mrf.mxu0
    %v137 = vadd.f32 0.0, %v136
    %v138 = vpop.f32.mrf.mxu0
    %139 = vdwg.mxu0
    %vm140 = vcmask 48128
    %v142 = vsel %vm140, %v35, 0
    %vm144 = vcmask 1045504
    %v146 = vsel %vm144, %v53, 0
    %148 = vmatprep.subr.mxu0 0.0
    %149 = vmatpush1.msra.mxu0 0.0
    %150 = vmatprep.subr.mxu0 0.0
    %151 = vmatpush1.msra.mxu0 0.0
    %152 = vmatprep.subr.mxu0 0.0
    %153 = vmatpush1.msra.mxu0 0.0
    %154 = vmatprep.subr.mxu0 0.0
    %155 = vmatpush1.msra.mxu0 0.0
    %156 = vmatprep.subr.mxu0 0.0
    %157 = vmatpush1.msra.mxu0 0.0
    %158 = vmatprep.subr.mxu0 0.0
    %159 = vmatpush1.msra.mxu0 0.0
    %160 = vmatprep.subr.mxu0 0.0
    %161 = vmatpush1.msra.mxu0 0.0
    %162 = vmatprep.subr.mxu0 0.0
    %163 = vmatpush1.msra.mxu0 0.0
    %164 = vmatprep.subr.mxu0 0.0
    %165 = vmatpush1.msra.mxu0 0.0
    %166 = vmatprep.subr.mxu0 0.0
    %167 = vmatpush1.msra.mxu0 0.0
    %168 = vmatprep.subr.mxu0 0.0
    %169 = vmatpush1.msra.mxu0 0.0
    %170 = vmatprep.subr.mxu0 0.0
    %171 = vmatpush1.msra.mxu0 0.0
    %172 = vmatprep.subr.mxu0 0.0
    %173 = vmatpush1.msra.mxu0 0.0
    %174 = vmatprep.subr.mxu0 0.0
    %175 = vmatpush1.msra.mxu0 0.0
    %176 = vmatprep.subr.mxu0 0.0
    %177 = vmatpush1.msra.mxu0 0.0
    %178 = vmatprep.subr.mxu0 0.0
    %179 = vmatpush1.msra.mxu0 %v146
    %180 = vmatprep.subr.mxu0 0.0
    %181 = vmatpush2.msra.mxu0 0.0
    %182 = vmatprep.subr.mxu0 0.0
    %183 = vmatpush2.msra.mxu0 0.0
    %184 = vmatprep.subr.mxu0 0.0
    %185 = vmatpush2.msra.mxu0 0.0
    %186 = vmatprep.subr.mxu0 0.0
    %187 = vmatpush2.msra.mxu0 0.0
    %188 = vmatprep.subr.mxu0 0.0
    %189 = vmatpush2.msra.mxu0 0.0
    %190 = vmatprep.subr.mxu0 0.0
    %191 = vmatpush2.msra.mxu0 0.0
    %192 = vmatprep.subr.mxu0 0.0
    %193 = vmatpush2.msra.mxu0 0.0
    %194 = vmatprep.subr.mxu0 0.0
    %195 = vmatpush2.msra.mxu0 0.0
    %196 = vmatprep.subr.mxu0 0.0
    %197 = vmatpush2.msra.mxu0 0.0
    %198 = vmatprep.subr.mxu0 0.0
    %199 = vmatpush2.msra.mxu0 0.0
    %200 = vmatprep.subr.mxu0 0.0
    %201 = vmatpush2.msra.mxu0 0.0
    %202 = vmatprep.subr.mxu0 0.0
    %203 = vmatpush2.msra.mxu0 0.0
    %204 = vmatprep.subr.mxu0 0.0
    %205 = vmatpush2.msra.mxu0 0.0
    %206 = vmatprep.subr.mxu0 0.0
    %207 = vmatpush2.msra.mxu0 0.0
    %208 = vmatprep.subr.mxu0 0.0
    %209 = vmatpush2.msra.mxu0 0.0
    %210 = vmatprep.subr.mxu0 0.0
    %211 = vmatpush2.msra.mxu0 0.0
    %212 = vmatprep.mubr.f32.mxu0 0.0
    %213 = vmatmul.mubr.f32.gmra.mxu0 %v142
    %v214 = vpop.f32.mrf.mxu0
    %v215 = vadd.f32 %v137, %v214
    %v216 = vpop.f32.mrf.mxu0
    %217 = vdwg.mxu0
    %v218 = vlaneseq
    %v219 = vshrl.u32 %v218, 7
    %v220 = vsub.s32 4, %v219
    %v221 = vrot.slane %v55, %v220
    %v222 = vadd.f32 %v215, %v221
    %v223 = vmin.f32 %v222, 20.0
    %v224 = vmul.f32 %v223, 1.442695
    %v225 = vpow.pop %v224
    %v226 = vadd.f32 %v225, 1.0
    %v227 = vmul.f32 %v226, %v226
    %v228 = vsub.f32 %v227, 1.0
    %v229 = vmul.f32 %v222, %v228
    %v230 = vadd.f32 %v227, 1.0
    %v231 = vrcp.pop %v230
    %v232 = vmul.f32 %v229, %v231
    %v233 = vlaneseq
    %v234 = vshrl.u32 %v233, 7
    %v235 = vsub.s32 0, %v234
    %v236 = vrot.slane %v52, %v235
    %vm237 = vcmask 523264
    %v239 = vsel %vm237, %v232, 0
    %241 = vmatprep.subr.mxu0 0.0
    %242 = vmatpush1.msra.mxu0 0.0
    %243 = vmatprep.subr.mxu0 0.0
    %244 = vmatpush1.msra.mxu0 0.0
    %245 = vmatprep.subr.mxu0 0.0
    %246 = vmatpush1.msra.mxu0 0.0
    %247 = vmatprep.subr.mxu0 0.0
    %248 = vmatpush1.msra.mxu0 0.0
    %249 = vmatprep.subr.mxu0 0.0
    %250 = vmatpush1.msra.mxu0 0.0
    %251 = vmatprep.subr.mxu0 0.0
    %252 = vmatpush1.msra.mxu0 0.0
    %253 = vmatprep.subr.mxu0 0.0
    %254 = vmatpush1.msra.mxu0 0.0
    %255 = vmatprep.subr.mxu0 0.0
    %256 = vmatpush1.msra.mxu0 0.0
    %257 = vmatprep.subr.mxu0 0.0
    %258 = vmatpush1.msra.mxu0 %v43
    %259 = vmatprep.subr.mxu0 0.0
    %260 = vmatpush1.msra.mxu0 %v42
    %261 = vmatprep.subr.mxu0 0.0
    %262 = vmatpush1.msra.mxu0 %v41
    %263 = vmatprep.subr.mxu0 0.0
    %264 = vmatpush1.msra.mxu0 %v40
    %265 = vmatprep.subr.mxu0 0.0
    %266 = vmatpush1.msra.mxu0 %v39
    %267 = vmatprep.subr.mxu0 0.0
    %268 = vmatpush1.msra.mxu0 %v38
    %269 = vmatprep.subr.mxu0 0.0
    %270 = vmatpush1.msra.mxu0 %v37
    %271 = vmatprep.subr.mxu0 0.0
    %272 = vmatpush1.msra.mxu0 %v36
    %273 = vmatprep.subr.mxu0 0.0
    %274 = vmatpush2.msra.mxu0 0.0
    %275 = vmatprep.subr.mxu0 0.0
    %276 = vmatpush2.msra.mxu0 0.0
    %277 = vmatprep.subr.mxu0 0.0
    %278 = vmatpush2.msra.mxu0 0.0
    %279 = vmatprep.subr.mxu0 0.0
    %280 = vmatpush2.msra.mxu0 0.0
    %281 = vmatprep.subr.mxu0 0.0
    %282 = vmatpush2.msra.mxu0 0.0
    %283 = vmatprep.subr.mxu0 0.0
    %284 = vmatpush2.msra.mxu0 0.0
    %285 = vmatprep.subr.mxu0 0.0
    %286 = vmatpush2.msra.mxu0 0.0
    %287 = vmatprep.subr.mxu0 0.0
    %288 = vmatpush2.msra.mxu0 0.0
    %289 = vmatprep.subr.mxu0 0.0
    %290 = vmatpush2.msra.mxu0 0.0
    %291 = vmatprep.subr.mxu0 0.0
    %292 = vmatpush2.msra.mxu0 0.0
    %293 = vmatprep.subr.mxu0 0.0
    %294 = vmatpush2.msra.mxu0 0.0
    %295 = vmatprep.subr.mxu0 0.0
    %296 = vmatpush2.msra.mxu0 0.0
    %297 = vmatprep.subr.mxu0 0.0
    %298 = vmatpush2.msra.mxu0 0.0
    %299 = vmatprep.subr.mxu0 0.0
    %300 = vmatpush2.msra.mxu0 0.0
    %301 = vmatprep.subr.mxu0 0.0
    %302 = vmatpush2.msra.mxu0 0.0
    %303 = vmatprep.subr.mxu0 0.0
    %304 = vmatpush2.msra.mxu0 0.0
    %305 = vmatprep.mubr.f32.mxu0 0.0
    %306 = vmatmul.mubr.f32.gmra.mxu0 %v239
    %v307 = vpop.f32.mrf.mxu0
    %v308 = vadd.f32 %v236, %v307
    %v309 = vpop.f32.mrf.mxu0
    %310 = vdwg.mxu0
    %v311 = vmin.f32 %v308, 20.0
    %v312 = vmul.f32 %v311, 1.442695
    %v313 = vpow.pop %v312
    %v314 = vadd.f32 %v313, 1.0
    %v315 = vmul.f32 %v314, %v314
    %v316 = vsub.f32 %v315, 1.0
    %v317 = vmul.f32 %v308, %v316
    %v318 = vadd.f32 %v315, 1.0
    %v319 = vrcp.pop %v318
    %v320 = vmul.f32 %v317, %v319
    %v321 = vlaneseq
    %v322 = vshrl.u32 %v321, 7
    %v323 = vsub.s32 1, %v322
    %v324 = vrot.slane %v52, %v323
    %v326 = vsel %vm237, %v320, 0
    %328 = vmatprep.subr.mxu0 0.0
    %329 = vmatpush1.msra.mxu0 0.0
    %330 = vmatprep.subr.mxu0 0.0
    %331 = vmatpush1.msra.mxu0 0.0
    %332 = vmatprep.subr.mxu0 0.0
    %333 = vmatpush1.msra.mxu0 0.0
    %334 = vmatprep.subr.mxu0 0.0
    %335 = vmatpush1.msra.mxu0 0.0
    %336 = vmatprep.subr.mxu0 0.0
    %337 = vmatpush1.msra.mxu0 0.0
    %338 = vmatprep.subr.mxu0 0.0
    %339 = vmatpush1.msra.mxu0 0.0
    %340 = vmatprep.subr.mxu0 0.0
    %341 = vmatpush1.msra.mxu0 0.0
    %342 = vmatprep.subr.mxu0 0.0
    %343 = vmatpush1.msra.mxu0 0.0
    %344 = vmatprep.subr.mxu0 0.0
    %345 = vmatpush1.msra.mxu0 %v51
    %346 = vmatprep.subr.mxu0 0.0
    %347 = vmatpush1.msra.mxu0 %v50
    %348 = vmatprep.subr.mxu0 0.0
    %349 = vmatpush1.msra.mxu0 %v49
    %350 = vmatprep.subr.mxu0 0.0
    %351 = vmatpush1.msra.mxu0 %v48
    %352 = vmatprep.subr.mxu0 0.0
    %353 = vmatpush1.msra.mxu0 %v47
    %354 = vmatprep.subr.mxu0 0.0
    %355 = vmatpush1.msra.mxu0 %v46
    %356 = vmatprep.subr.mxu0 0.0
    %357 = vmatpush1.msra.mxu0 %v45
    %358 = vmatprep.subr.mxu0 0.0
    %359 = vmatpush1.msra.mxu0 %v44
    %360 = vmatprep.subr.mxu0 0.0
    %361 = vmatpush2.msra.mxu0 0.0
    %362 = vmatprep.subr.mxu0 0.0
    %363 = vmatpush2.msra.mxu0 0.0
    %364 = vmatprep.subr.mxu0 0.0
    %365 = vmatpush2.msra.mxu0 0.0
    %366 = vmatprep.subr.mxu0 0.0
    %367 = vmatpush2.msra.mxu0 0.0
    %368 = vmatprep.subr.mxu0 0.0
    %369 = vmatpush2.msra.mxu0 0.0
    %370 = vmatprep.subr.mxu0 0.0
    %371 = vmatpush2.msra.mxu0 0.0
    %372 = vmatprep.subr.mxu0 0.0
    %373 = vmatpush2.msra.mxu0 0.0
    %374 = vmatprep.subr.mxu0 0.0
    %375 = vmatpush2.msra.mxu0 0.0
    %376 = vmatprep.subr.mxu0 0.0
    %377 = vmatpush2.msra.mxu0 0.0
    %378 = vmatprep.subr.mxu0 0.0
    %379 = vmatpush2.msra.mxu0 0.0
    %380 = vmatprep.subr.mxu0 0.0
    %381 = vmatpush2.msra.mxu0 0.0
    %382 = vmatprep.subr.mxu0 0.0
    %383 = vmatpush2.msra.mxu0 0.0
    %384 = vmatprep.subr.mxu0 0.0
    %385 = vmatpush2.msra.mxu0 0.0
    %386 = vmatprep.subr.mxu0 0.0
    %387 = vmatpush2.msra.mxu0 0.0
    %388 = vmatprep.subr.mxu0 0.0
    %389 = vmatpush2.msra.mxu0 0.0
    %390 = vmatprep.subr.mxu0 0.0
    %391 = vmatpush2.msra.mxu0 0.0
    %392 = vmatprep.mubr.f32.mxu0 0.0
    %393 = vmatmul.mubr.f32.gmra.mxu0 %v326
    %v394 = vpop.f32.mrf.mxu0
    %v395 = vadd.f32 %v324, %v394
    %v396 = vpop.f32.mrf.mxu0
    %397 = vdwg.mxu0
    %v398 = vmin.f32 %v395, 20.0
    %v399 = vmul.f32 %v398, 1.442695
    %v400 = vpow.pop %v399
    %v401 = vadd.f32 %v400, 1.0
    %v402 = vmul.f32 %v401, %v401
    %v403 = vsub.f32 %v402, 1.0
    %v404 = vmul.f32 %v395, %v403
    %v405 = vadd.f32 %v402, 1.0
    %v406 = vrcp.pop %v405
    %v407 = vmul.f32 %v404, %v406
    %v408 = vlaneseq
    %v409 = vshrl.u32 %v408, 7
    %v410 = vsub.s32 0, %v409
    %v411 = vrot.slane %v64, %v410
    %v413 = vsel %vm237, %v407, 0
    %415 = vmatprep.subr.mxu0 0.0
    %416 = vmatpush1.msra.mxu0 0.0
    %417 = vmatprep.subr.mxu0 0.0
    %418 = vmatpush1.msra.mxu0 0.0
    %419 = vmatprep.subr.mxu0 0.0
    %420 = vmatpush1.msra.mxu0 0.0
    %421 = vmatprep.subr.mxu0 0.0
    %422 = vmatpush1.msra.mxu0 0.0
    %423 = vmatprep.subr.mxu0 0.0
    %424 = vmatpush1.msra.mxu0 0.0
    %425 = vmatprep.subr.mxu0 0.0
    %426 = vmatpush1.msra.mxu0 0.0
    %427 = vmatprep.subr.mxu0 0.0
    %428 = vmatpush1.msra.mxu0 0.0
    %429 = vmatprep.subr.mxu0 0.0
    %430 = vmatpush1.msra.mxu0 0.0
    %431 = vmatprep.subr.mxu0 0.0
    %432 = vmatpush1.msra.mxu0 %v63
    %433 = vmatprep.subr.mxu0 0.0
    %434 = vmatpush1.msra.mxu0 %v62
    %435 = vmatprep.subr.mxu0 0.0
    %436 = vmatpush1.msra.mxu0 %v61
    %437 = vmatprep.subr.mxu0 0.0
    %438 = vmatpush1.msra.mxu0 %v60
    %439 = vmatprep.subr.mxu0 0.0
    %440 = vmatpush1.msra.mxu0 %v59
    %441 = vmatprep.subr.mxu0 0.0
    %442 = vmatpush1.msra.mxu0 %v58
    %443 = vmatprep.subr.mxu0 0.0
    %444 = vmatpush1.msra.mxu0 %v57
    %445 = vmatprep.subr.mxu0 0.0
    %446 = vmatpush1.msra.mxu0 %v56
    %447 = vmatprep.subr.mxu0 0.0
    %448 = vmatpush2.msra.mxu0 0.0
    %449 = vmatprep.subr.mxu0 0.0
    %450 = vmatpush2.msra.mxu0 0.0
    %451 = vmatprep.subr.mxu0 0.0
    %452 = vmatpush2.msra.mxu0 0.0
    %453 = vmatprep.subr.mxu0 0.0
    %454 = vmatpush2.msra.mxu0 0.0
    %455 = vmatprep.subr.mxu0 0.0
    %456 = vmatpush2.msra.mxu0 0.0
    %457 = vmatprep.subr.mxu0 0.0
    %458 = vmatpush2.msra.mxu0 0.0
    %459 = vmatprep.subr.mxu0 0.0
    %460 = vmatpush2.msra.mxu0 0.0
    %461 = vmatprep.subr.mxu0 0.0
    %462 = vmatpush2.msra.mxu0 0.0
    %463 = vmatprep.subr.mxu0 0.0
    %464 = vmatpush2.msra.mxu0 0.0
    %465 = vmatprep.subr.mxu0 0.0
    %466 = vmatpush2.msra.mxu0 0.0
    %467 = vmatprep.subr.mxu0 0.0
    %468 = vmatpush2.msra.mxu0 0.0
    %469 = vmatprep.subr.mxu0 0.0
    %470 = vmatpush2.msra.mxu0 0.0
    %471 = vmatprep.subr.mxu0 0.0
    %472 = vmatpush2.msra.mxu0 0.0
    %473 = vmatprep.subr.mxu0 0.0
    %474 = vmatpush2.msra.mxu0 0.0
    %475 = vmatprep.subr.mxu0 0.0
    %476 = vmatpush2.msra.mxu0 0.0
    %477 = vmatprep.subr.mxu0 0.0
    %478 = vmatpush2.msra.mxu0 0.0
    %479 = vmatprep.mubr.f32.mxu0 0.0
    %480 = vmatmul.mubr.f32.gmra.mxu0 %v413
    %v481 = vpop.f32.mrf.mxu0
    %v482 = vadd.f32 %v411, %v481
    %v483 = vpop.f32.mrf.mxu0
    %484 = vdwg.mxu0
    %s485 = sld [smem:[#allocation2 + $0x20]]
    %s486 = sld [smem:[#allocation2 + $0x21]]
    %s487 = sld [smem:[#allocation2 + $0x22]]
    %s488 = sld [smem:[#allocation2 + $0x23]]
    %s489 = sld [smem:[#allocation2 + $0x24]]
    %v490 = vstv %s485
    %v491 = vmul.f32 %v490, %v35
    %v492 = vstv %s486
    %v493 = vmul.f32 %v492, %v482
    %v494 = vsub.f32 %v491, %v493
    %v495 = vmax.f32 %v494, -1.0
    %v496 = vmin.f32 %v495, 1.0
    %v497 = vstv %s487
    %v498 = vmul.f32 %v497, %v496
    %v499 = vstv %s488
    %v500 = vmul.f32 %v499, %v35
    %v501 = vadd.f32 %v498, %v500
    %s502 = scalar_lea.vmem %s1, 16
    %v503 = vld [vmem:[%s502] sm:$0xf]
    %v504 = vstv %s489
    %v505 = vmul.f32 %v504, %v503
    %v506 = vadd.f32 %v501, %v505
    %v508 = vsel %vm140, %v506, 0
    %510 = vmatprep.subr.mxu0 0.0
    %511 = vmatpush1.msra.mxu0 0.0
    %512 = vmatprep.subr.mxu0 0.0
    %513 = vmatpush1.msra.mxu0 0.0
    %514 = vmatprep.subr.mxu0 0.0
    %515 = vmatpush1.msra.mxu0 0.0
    %516 = vmatprep.subr.mxu0 0.0
    %517 = vmatpush1.msra.mxu0 0.0
    %518 = vmatprep.subr.mxu0 0.0
    %519 = vmatpush1.msra.mxu0 0.0
    %520 = vmatprep.subr.mxu0 0.0
    %521 = vmatpush1.msra.mxu0 0.0
    %522 = vmatprep.subr.mxu0 0.0
    %523 = vmatpush1.msra.mxu0 0.0
    %524 = vmatprep.subr.mxu0 0.0
    %525 = vmatpush1.msra.mxu0 0.0
    %526 = vmatprep.subr.mxu0 0.0
    %527 = vmatpush1.msra.mxu0 0.0
    %528 = vmatprep.subr.mxu0 0.0
    %529 = vmatpush1.msra.mxu0 0.0
    %530 = vmatprep.subr.mxu0 0.0
    %531 = vmatpush1.msra.mxu0 0.0
    %532 = vmatprep.subr.mxu0 0.0
    %533 = vmatpush1.msra.mxu0 0.0
    %534 = vmatprep.subr.mxu0 0.0
    %535 = vmatpush1.msra.mxu0 0.0
    %536 = vmatprep.subr.mxu0 0.0
    %537 = vmatpush1.msra.mxu0 0.0
    %538 = vmatprep.subr.mxu0 0.0
    %539 = vmatpush1.msra.mxu0 0.0
    %540 = vmatprep.subr.mxu0 0.0
    %541 = vmatpush1.msra.mxu0 %v146
    %542 = vmatprep.subr.mxu0 0.0
    %543 = vmatpush2.msra.mxu0 0.0
    %544 = vmatprep.subr.mxu0 0.0
    %545 = vmatpush2.msra.mxu0 0.0
    %546 = vmatprep.subr.mxu0 0.0
    %547 = vmatpush2.msra.mxu0 0.0
    %548 = vmatprep.subr.mxu0 0.0
    %549 = vmatpush2.msra.mxu0 0.0
    %550 = vmatprep.subr.mxu0 0.0
    %551 = vmatpush2.msra.mxu0 0.0
    %552 = vmatprep.subr.mxu0 0.0
    %553 = vmatpush2.msra.mxu0 0.0
    %554 = vmatprep.subr.mxu0 0.0
    %555 = vmatpush2.msra.mxu0 0.0
    %556 = vmatprep.subr.mxu0 0.0
    %557 = vmatpush2.msra.mxu0 0.0
    %558 = vmatprep.subr.mxu0 0.0
    %559 = vmatpush2.msra.mxu0 0.0
    %560 = vmatprep.subr.mxu0 0.0
    %561 = vmatpush2.msra.mxu0 0.0
    %562 = vmatprep.subr.mxu0 0.0
    %563 = vmatpush2.msra.mxu0 0.0
    %564 = vmatprep.subr.mxu0 0.0
    %565 = vmatpush2.msra.mxu0 0.0
    %566 = vmatprep.subr.mxu0 0.0
    %567 = vmatpush2.msra.mxu0 0.0
    %568 = vmatprep.subr.mxu0 0.0
    %569 = vmatpush2.msra.mxu0 0.0
    %570 = vmatprep.subr.mxu0 0.0
    %571 = vmatpush2.msra.mxu0 0.0
    %572 = vmatprep.subr.mxu0 0.0
    %573 = vmatpush2.msra.mxu0 0.0
    %574 = vmatprep.mubr.f32.mxu0 0.0
    %575 = vmatmul.mubr.f32.gmra.mxu0 %v508
    %v576 = vpop.f32.mrf.mxu0
    %v577 = vadd.f32 %v137, %v576
    %v578 = vpop.f32.mrf.mxu0
    %579 = vdwg.mxu0
    %v580 = vlaneseq
    %v581 = vshrl.u32 %v580, 7
    %v582 = vsub.s32 3, %v581
    %v583 = vrot.slane %v55, %v582
    %v584 = vadd.f32 %v577, %v583
    %v585 = vmin.f32 %v584, 20.0
    %v586 = vmul.f32 %v585, 1.442695
    %v587 = vpow.pop %v586
    %v588 = vadd.f32 %v587, 1.0
    %v589 = vmul.f32 %v588, %v588
    %v590 = vsub.f32 %v589, 1.0
    %v591 = vmul.f32 %v584, %v590
    %v592 = vadd.f32 %v589, 1.0
    %v593 = vrcp.pop %v592
    %v594 = vmul.f32 %v591, %v593
    %v596 = vsel %vm237, %v594, 0
    %598 = vmatprep.subr.mxu0 0.0
    %599 = vmatpush1.msra.mxu0 0.0
    %600 = vmatprep.subr.mxu0 0.0
    %601 = vmatpush1.msra.mxu0 0.0
    %602 = vmatprep.subr.mxu0 0.0
    %603 = vmatpush1.msra.mxu0 0.0
    %604 = vmatprep.subr.mxu0 0.0
    %605 = vmatpush1.msra.mxu0 0.0
    %606 = vmatprep.subr.mxu0 0.0
    %607 = vmatpush1.msra.mxu0 0.0
    %608 = vmatprep.subr.mxu0 0.0
    %609 = vmatpush1.msra.mxu0 0.0
    %610 = vmatprep.subr.mxu0 0.0
    %611 = vmatpush1.msra.mxu0 0.0
    %612 = vmatprep.subr.mxu0 0.0
    %613 = vmatpush1.msra.mxu0 0.0
    %614 = vmatprep.subr.mxu0 0.0
    %615 = vmatpush1.msra.mxu0 %v43
    %616 = vmatprep.subr.mxu0 0.0
    %617 = vmatpush1.msra.mxu0 %v42
    %618 = vmatprep.subr.mxu0 0.0
    %619 = vmatpush1.msra.mxu0 %v41
    %620 = vmatprep.subr.mxu0 0.0
    %621 = vmatpush1.msra.mxu0 %v40
    %622 = vmatprep.subr.mxu0 0.0
    %623 = vmatpush1.msra.mxu0 %v39
    %624 = vmatprep.subr.mxu0 0.0
    %625 = vmatpush1.msra.mxu0 %v38
    %626 = vmatprep.subr.mxu0 0.0
    %627 = vmatpush1.msra.mxu0 %v37
    %628 = vmatprep.subr.mxu0 0.0
    %629 = vmatpush1.msra.mxu0 %v36
    %630 = vmatprep.subr.mxu0 0.0
    %631 = vmatpush2.msra.mxu0 0.0
    %632 = vmatprep.subr.mxu0 0.0
    %633 = vmatpush2.msra.mxu0 0.0
    %634 = vmatprep.subr.mxu0 0.0
    %635 = vmatpush2.msra.mxu0 0.0
    %636 = vmatprep.subr.mxu0 0.0
    %637 = vmatpush2.msra.mxu0 0.0
    %638 = vmatprep.subr.mxu0 0.0
    %639 = vmatpush2.msra.mxu0 0.0
    %640 = vmatprep.subr.mxu0 0.0
    %641 = vmatpush2.msra.mxu0 0.0
    %642 = vmatprep.subr.mxu0 0.0
    %643 = vmatpush2.msra.mxu0 0.0
    %644 = vmatprep.subr.mxu0 0.0
    %645 = vmatpush2.msra.mxu0 0.0
    %646 = vmatprep.subr.mxu0 0.0
    %647 = vmatpush2.msra.mxu0 0.0
    %648 = vmatprep.subr.mxu0 0.0
    %649 = vmatpush2.msra.mxu0 0.0
    %650 = vmatprep.subr.mxu0 0.0
    %651 = vmatpush2.msra.mxu0 0.0
    %652 = vmatprep.subr.mxu0 0.0
    %653 = vmatpush2.msra.mxu0 0.0
    %654 = vmatprep.subr.mxu0 0.0
    %655 = vmatpush2.msra.mxu0 0.0
    %656 = vmatprep.subr.mxu0 0.0
    %657 = vmatpush2.msra.mxu0 0.0
    %658 = vmatprep.subr.mxu0 0.0
    %659 = vmatpush2.msra.mxu0 0.0
    %660 = vmatprep.subr.mxu0 0.0
    %661 = vmatpush2.msra.mxu0 0.0
    %662 = vmatprep.mubr.f32.mxu0 0.0
    %663 = vmatmul.mubr.f32.gmra.mxu0 %v596
    %v664 = vpop.f32.mrf.mxu0
    %v665 = vadd.f32 %v236, %v664
    %v666 = vpop.f32.mrf.mxu0
    %667 = vdwg.mxu0
    %v668 = vmin.f32 %v665, 20.0
    %v669 = vmul.f32 %v668, 1.442695
    %v670 = vpow.pop %v669
    %v671 = vadd.f32 %v670, 1.0
    %v672 = vmul.f32 %v671, %v671
    %v673 = vsub.f32 %v672, 1.0
    %v674 = vmul.f32 %v665, %v673
    %v675 = vadd.f32 %v672, 1.0
    %v676 = vrcp.pop %v675
    %v677 = vmul.f32 %v674, %v676
    %v679 = vsel %vm237, %v677, 0
    %681 = vmatprep.subr.mxu0 0.0
    %682 = vmatpush1.msra.mxu0 0.0
    %683 = vmatprep.subr.mxu0 0.0
    %684 = vmatpush1.msra.mxu0 0.0
    %685 = vmatprep.subr.mxu0 0.0
    %686 = vmatpush1.msra.mxu0 0.0
    %687 = vmatprep.subr.mxu0 0.0
    %688 = vmatpush1.msra.mxu0 0.0
    %689 = vmatprep.subr.mxu0 0.0
    %690 = vmatpush1.msra.mxu0 0.0
    %691 = vmatprep.subr.mxu0 0.0
    %692 = vmatpush1.msra.mxu0 0.0
    %693 = vmatprep.subr.mxu0 0.0
    %694 = vmatpush1.msra.mxu0 0.0
    %695 = vmatprep.subr.mxu0 0.0
    %696 = vmatpush1.msra.mxu0 0.0
    %697 = vmatprep.subr.mxu0 0.0
    %698 = vmatpush1.msra.mxu0 %v51
    %699 = vmatprep.subr.mxu0 0.0
    %700 = vmatpush1.msra.mxu0 %v50
    %701 = vmatprep.subr.mxu0 0.0
    %702 = vmatpush1.msra.mxu0 %v49
    %703 = vmatprep.subr.mxu0 0.0
    %704 = vmatpush1.msra.mxu0 %v48
    %705 = vmatprep.subr.mxu0 0.0
    %706 = vmatpush1.msra.mxu0 %v47
    %707 = vmatprep.subr.mxu0 0.0
    %708 = vmatpush1.msra.mxu0 %v46
    %709 = vmatprep.subr.mxu0 0.0
    %710 = vmatpush1.msra.mxu0 %v45
    %711 = vmatprep.subr.mxu0 0.0
    %712 = vmatpush1.msra.mxu0 %v44
    %713 = vmatprep.subr.mxu0 0.0
    %714 = vmatpush2.msra.mxu0 0.0
    %715 = vmatprep.subr.mxu0 0.0
    %716 = vmatpush2.msra.mxu0 0.0
    %717 = vmatprep.subr.mxu0 0.0
    %718 = vmatpush2.msra.mxu0 0.0
    %719 = vmatprep.subr.mxu0 0.0
    %720 = vmatpush2.msra.mxu0 0.0
    %721 = vmatprep.subr.mxu0 0.0
    %722 = vmatpush2.msra.mxu0 0.0
    %723 = vmatprep.subr.mxu0 0.0
    %724 = vmatpush2.msra.mxu0 0.0
    %725 = vmatprep.subr.mxu0 0.0
    %726 = vmatpush2.msra.mxu0 0.0
    %727 = vmatprep.subr.mxu0 0.0
    %728 = vmatpush2.msra.mxu0 0.0
    %729 = vmatprep.subr.mxu0 0.0
    %730 = vmatpush2.msra.mxu0 0.0
    %731 = vmatprep.subr.mxu0 0.0
    %732 = vmatpush2.msra.mxu0 0.0
    %733 = vmatprep.subr.mxu0 0.0
    %734 = vmatpush2.msra.mxu0 0.0
    %735 = vmatprep.subr.mxu0 0.0
    %736 = vmatpush2.msra.mxu0 0.0
    %737 = vmatprep.subr.mxu0 0.0
    %738 = vmatpush2.msra.mxu0 0.0
    %739 = vmatprep.subr.mxu0 0.0
    %740 = vmatpush2.msra.mxu0 0.0
    %741 = vmatprep.subr.mxu0 0.0
    %742 = vmatpush2.msra.mxu0 0.0
    %743 = vmatprep.subr.mxu0 0.0
    %744 = vmatpush2.msra.mxu0 0.0
    %745 = vmatprep.mubr.f32.mxu0 0.0
    %746 = vmatmul.mubr.f32.gmra.mxu0 %v679
    %v747 = vpop.f32.mrf.mxu0
    %v748 = vadd.f32 %v324, %v747
    %v749 = vpop.f32.mrf.mxu0
    %750 = vdwg.mxu0
    %v751 = vmin.f32 %v748, 20.0
    %v752 = vmul.f32 %v751, 1.442695
    %v753 = vpow.pop %v752
    %v754 = vadd.f32 %v753, 1.0
    %v755 = vmul.f32 %v754, %v754
    %v756 = vsub.f32 %v755, 1.0
    %v757 = vmul.f32 %v748, %v756
    %v758 = vadd.f32 %v755, 1.0
    %v759 = vrcp.pop %v758
    %v760 = vmul.f32 %v757, %v759
    %v762 = vsel %vm237, %v760, 0
    %764 = vmatprep.subr.mxu0 0.0
    %765 = vmatpush1.msra.mxu0 0.0
    %766 = vmatprep.subr.mxu0 0.0
    %767 = vmatpush1.msra.mxu0 0.0
    %768 = vmatprep.subr.mxu0 0.0
    %769 = vmatpush1.msra.mxu0 0.0
    %770 = vmatprep.subr.mxu0 0.0
    %771 = vmatpush1.msra.mxu0 0.0
    %772 = vmatprep.subr.mxu0 0.0
    %773 = vmatpush1.msra.mxu0 0.0
    %774 = vmatprep.subr.mxu0 0.0
    %775 = vmatpush1.msra.mxu0 0.0
    %776 = vmatprep.subr.mxu0 0.0
    %777 = vmatpush1.msra.mxu0 0.0
    %778 = vmatprep.subr.mxu0 0.0
    %779 = vmatpush1.msra.mxu0 0.0
    %780 = vmatprep.subr.mxu0 0.0
    %781 = vmatpush1.msra.mxu0 %v63
    %782 = vmatprep.subr.mxu0 0.0
    %783 = vmatpush1.msra.mxu0 %v62
    %784 = vmatprep.subr.mxu0 0.0
    %785 = vmatpush1.msra.mxu0 %v61
    %786 = vmatprep.subr.mxu0 0.0
    %787 = vmatpush1.msra.mxu0 %v60
    %788 = vmatprep.subr.mxu0 0.0
    %789 = vmatpush1.msra.mxu0 %v59
    %790 = vmatprep.subr.mxu0 0.0
    %791 = vmatpush1.msra.mxu0 %v58
    %792 = vmatprep.subr.mxu0 0.0
    %793 = vmatpush1.msra.mxu0 %v57
    %794 = vmatprep.subr.mxu0 0.0
    %795 = vmatpush1.msra.mxu0 %v56
    %796 = vmatprep.subr.mxu0 0.0
    %797 = vmatpush2.msra.mxu0 0.0
    %798 = vmatprep.subr.mxu0 0.0
    %799 = vmatpush2.msra.mxu0 0.0
    %800 = vmatprep.subr.mxu0 0.0
    %801 = vmatpush2.msra.mxu0 0.0
    %802 = vmatprep.subr.mxu0 0.0
    %803 = vmatpush2.msra.mxu0 0.0
    %804 = vmatprep.subr.mxu0 0.0
    %805 = vmatpush2.msra.mxu0 0.0
    %806 = vmatprep.subr.mxu0 0.0
    %807 = vmatpush2.msra.mxu0 0.0
    %808 = vmatprep.subr.mxu0 0.0
    %809 = vmatpush2.msra.mxu0 0.0
    %810 = vmatprep.subr.mxu0 0.0
    %811 = vmatpush2.msra.mxu0 0.0
    %812 = vmatprep.subr.mxu0 0.0
    %813 = vmatpush2.msra.mxu0 0.0
    %814 = vmatprep.subr.mxu0 0.0
    %815 = vmatpush2.msra.mxu0 0.0
    %816 = vmatprep.subr.mxu0 0.0
    %817 = vmatpush2.msra.mxu0 0.0
    %818 = vmatprep.subr.mxu0 0.0
    %819 = vmatpush2.msra.mxu0 0.0
    %820 = vmatprep.subr.mxu0 0.0
    %821 = vmatpush2.msra.mxu0 0.0
    %822 = vmatprep.subr.mxu0 0.0
    %823 = vmatpush2.msra.mxu0 0.0
    %824 = vmatprep.subr.mxu0 0.0
    %825 = vmatpush2.msra.mxu0 0.0
    %826 = vmatprep.subr.mxu0 0.0
    %827 = vmatpush2.msra.mxu0 0.0
    %828 = vmatprep.mubr.f32.mxu0 0.0
    %829 = vmatmul.mubr.f32.gmra.mxu0 %v762
    %v830 = vpop.f32.mrf.mxu0
    %v831 = vadd.f32 %v411, %v830
    %v832 = vpop.f32.mrf.mxu0
    %833 = vdwg.mxu0
    %s834 = sld [smem:[#allocation2 + $0x18]]
    %s835 = sld [smem:[#allocation2 + $0x19]]
    %s836 = sld [smem:[#allocation2 + $0x1a]]
    %s837 = sld [smem:[#allocation2 + $0x1b]]
    %s838 = sld [smem:[#allocation2 + $0x1c]]
    %v839 = vstv %s834
    %v840 = vmul.f32 %v839, %v506
    %v841 = vstv %s835
    %v842 = vmul.f32 %v841, %v831
    %v843 = vsub.f32 %v840, %v842
    %v844 = vmax.f32 %v843, -1.0
    %v845 = vmin.f32 %v844, 1.0
    %v846 = vstv %s836
    %v847 = vmul.f32 %v846, %v845
    %v848 = vstv %s837
    %v849 = vmul.f32 %v848, %v506
    %v850 = vadd.f32 %v847, %v849
    %s851 = scalar_lea.vmem %s1, 12
    %v852 = vld [vmem:[%s851] sm:$0xf]
    %v853 = vstv %s838
    %v854 = vmul.f32 %v853, %v852
    %v855 = vadd.f32 %v850, %v854
    %v857 = vsel %vm140, %v855, 0
    %859 = vmatprep.subr.mxu0 0.0
    %860 = vmatpush1.msra.mxu0 0.0
    %861 = vmatprep.subr.mxu0 0.0
    %862 = vmatpush1.msra.mxu0 0.0
    %863 = vmatprep.subr.mxu0 0.0
    %864 = vmatpush1.msra.mxu0 0.0
    %865 = vmatprep.subr.mxu0 0.0
    %866 = vmatpush1.msra.mxu0 0.0
    %867 = vmatprep.subr.mxu0 0.0
    %868 = vmatpush1.msra.mxu0 0.0
    %869 = vmatprep.subr.mxu0 0.0
    %870 = vmatpush1.msra.mxu0 0.0
    %871 = vmatprep.subr.mxu0 0.0
    %872 = vmatpush1.msra.mxu0 0.0
    %873 = vmatprep.subr.mxu0 0.0
    %874 = vmatpush1.msra.mxu0 0.0
    %875 = vmatprep.subr.mxu0 0.0
    %876 = vmatpush1.msra.mxu0 0.0
    %877 = vmatprep.subr.mxu0 0.0
    %878 = vmatpush1.msra.mxu0 0.0
    %879 = vmatprep.subr.mxu0 0.0
    %880 = vmatpush1.msra.mxu0 0.0
    %881 = vmatprep.subr.mxu0 0.0
    %882 = vmatpush1.msra.mxu0 0.0
    %883 = vmatprep.subr.mxu0 0.0
    %884 = vmatpush1.msra.mxu0 0.0
    %885 = vmatprep.subr.mxu0 0.0
    %886 = vmatpush1.msra.mxu0 0.0
    %887 = vmatprep.subr.mxu0 0.0
    %888 = vmatpush1.msra.mxu0 0.0
    %889 = vmatprep.subr.mxu0 0.0
    %890 = vmatpush1.msra.mxu0 %v146
    %891 = vmatprep.subr.mxu0 0.0
    %892 = vmatpush2.msra.mxu0 0.0
    %893 = vmatprep.subr.mxu0 0.0
    %894 = vmatpush2.msra.mxu0 0.0
    %895 = vmatprep.subr.mxu0 0.0
    %896 = vmatpush2.msra.mxu0 0.0
    %897 = vmatprep.subr.mxu0 0.0
    %898 = vmatpush2.msra.mxu0 0.0
    %899 = vmatprep.subr.mxu0 0.0
    %900 = vmatpush2.msra.mxu0 0.0
    %901 = vmatprep.subr.mxu0 0.0
    %902 = vmatpush2.msra.mxu0 0.0
    %903 = vmatprep.subr.mxu0 0.0
    %904 = vmatpush2.msra.mxu0 0.0
    %905 = vmatprep.subr.mxu0 0.0
    %906 = vmatpush2.msra.mxu0 0.0
    %907 = vmatprep.subr.mxu0 0.0
    %908 = vmatpush2.msra.mxu0 0.0
    %909 = vmatprep.subr.mxu0 0.0
    %910 = vmatpush2.msra.mxu0 0.0
    %911 = vmatprep.subr.mxu0 0.0
    %912 = vmatpush2.msra.mxu0 0.0
    %913 = vmatprep.subr.mxu0 0.0
    %914 = vmatpush2.msra.mxu0 0.0
    %915 = vmatprep.subr.mxu0 0.0
    %916 = vmatpush2.msra.mxu0 0.0
    %917 = vmatprep.subr.mxu0 0.0
    %918 = vmatpush2.msra.mxu0 0.0
    %919 = vmatprep.subr.mxu0 0.0
    %920 = vmatpush2.msra.mxu0 0.0
    %921 = vmatprep.subr.mxu0 0.0
    %922 = vmatpush2.msra.mxu0 0.0
    %923 = vmatprep.mubr.f32.mxu0 0.0
    %924 = vmatmul.mubr.f32.gmra.mxu0 %v857
    %v925 = vpop.f32.mrf.mxu0
    %v926 = vadd.f32 %v137, %v925
    %v927 = vpop.f32.mrf.mxu0
    %928 = vdwg.mxu0
    %v929 = vlaneseq
    %v930 = vshrl.u32 %v929, 7
    %v931 = vsub.s32 2, %v930
    %v932 = vrot.slane %v55, %v931
    %v933 = vadd.f32 %v926, %v932
    %v934 = vmin.f32 %v933, 20.0
    %v935 = vmul.f32 %v934, 1.442695
    %v936 = vpow.pop %v935
    %v937 = vadd.f32 %v936, 1.0
    %v938 = vmul.f32 %v937, %v937
    %v939 = vsub.f32 %v938, 1.0
    %v940 = vmul.f32 %v933, %v939
    %v941 = vadd.f32 %v938, 1.0
    %v942 = vrcp.pop %v941
    %v943 = vmul.f32 %v940, %v942
    %v945 = vsel %vm237, %v943, 0
    %947 = vmatprep.subr.mxu0 0.0
    %948 = vmatpush1.msra.mxu0 0.0
    %949 = vmatprep.subr.mxu0 0.0
    %950 = vmatpush1.msra.mxu0 0.0
    %951 = vmatprep.subr.mxu0 0.0
    %952 = vmatpush1.msra.mxu0 0.0
    %953 = vmatprep.subr.mxu0 0.0
    %954 = vmatpush1.msra.mxu0 0.0
    %955 = vmatprep.subr.mxu0 0.0
    %956 = vmatpush1.msra.mxu0 0.0
    %957 = vmatprep.subr.mxu0 0.0
    %958 = vmatpush1.msra.mxu0 0.0
    %959 = vmatprep.subr.mxu0 0.0
    %960 = vmatpush1.msra.mxu0 0.0
    %961 = vmatprep.subr.mxu0 0.0
    %962 = vmatpush1.msra.mxu0 0.0
    %963 = vmatprep.subr.mxu0 0.0
    %964 = vmatpush1.msra.mxu0 %v43
    %965 = vmatprep.subr.mxu0 0.0
    %966 = vmatpush1.msra.mxu0 %v42
    %967 = vmatprep.subr.mxu0 0.0
    %968 = vmatpush1.msra.mxu0 %v41
    %969 = vmatprep.subr.mxu0 0.0
    %970 = vmatpush1.msra.mxu0 %v40
    %971 = vmatprep.subr.mxu0 0.0
    %972 = vmatpush1.msra.mxu0 %v39
    %973 = vmatprep.subr.mxu0 0.0
    %974 = vmatpush1.msra.mxu0 %v38
    %975 = vmatprep.subr.mxu0 0.0
    %976 = vmatpush1.msra.mxu0 %v37
    %977 = vmatprep.subr.mxu0 0.0
    %978 = vmatpush1.msra.mxu0 %v36
    %979 = vmatprep.subr.mxu0 0.0
    %980 = vmatpush2.msra.mxu0 0.0
    %981 = vmatprep.subr.mxu0 0.0
    %982 = vmatpush2.msra.mxu0 0.0
    %983 = vmatprep.subr.mxu0 0.0
    %984 = vmatpush2.msra.mxu0 0.0
    %985 = vmatprep.subr.mxu0 0.0
    %986 = vmatpush2.msra.mxu0 0.0
    %987 = vmatprep.subr.mxu0 0.0
    %988 = vmatpush2.msra.mxu0 0.0
    %989 = vmatprep.subr.mxu0 0.0
    %990 = vmatpush2.msra.mxu0 0.0
    %991 = vmatprep.subr.mxu0 0.0
    %992 = vmatpush2.msra.mxu0 0.0
    %993 = vmatprep.subr.mxu0 0.0
    %994 = vmatpush2.msra.mxu0 0.0
    %995 = vmatprep.subr.mxu0 0.0
    %996 = vmatpush2.msra.mxu0 0.0
    %997 = vmatprep.subr.mxu0 0.0
    %998 = vmatpush2.msra.mxu0 0.0
    %999 = vmatprep.subr.mxu0 0.0
    %1000 = vmatpush2.msra.mxu0 0.0
    %1001 = vmatprep.subr.mxu0 0.0
    %1002 = vmatpush2.msra.mxu0 0.0
    %1003 = vmatprep.subr.mxu0 0.0
    %1004 = vmatpush2.msra.mxu0 0.0
    %1005 = vmatprep.subr.mxu0 0.0
    %1006 = vmatpush2.msra.mxu0 0.0
    %1007 = vmatprep.subr.mxu0 0.0
    %1008 = vmatpush2.msra.mxu0 0.0
    %1009 = vmatprep.subr.mxu0 0.0
    %1010 = vmatpush2.msra.mxu0 0.0
    %1011 = vmatprep.mubr.f32.mxu0 0.0
    %1012 = vmatmul.mubr.f32.gmra.mxu0 %v945
    %v1013 = vpop.f32.mrf.mxu0
    %v1014 = vadd.f32 %v236, %v1013
    %v1015 = vpop.f32.mrf.mxu0
    %1016 = vdwg.mxu0
    %v1017 = vmin.f32 %v1014, 20.0
    %v1018 = vmul.f32 %v1017, 1.442695
    %v1019 = vpow.pop %v1018
    %v1020 = vadd.f32 %v1019, 1.0
    %v1021 = vmul.f32 %v1020, %v1020
    %v1022 = vsub.f32 %v1021, 1.0
    %v1023 = vmul.f32 %v1014, %v1022
    %v1024 = vadd.f32 %v1021, 1.0
    %v1025 = vrcp.pop %v1024
    %v1026 = vmul.f32 %v1023, %v1025
    %v1028 = vsel %vm237, %v1026, 0
    %1030 = vmatprep.subr.mxu0 0.0
    %1031 = vmatpush1.msra.mxu0 0.0
    %1032 = vmatprep.subr.mxu0 0.0
    %1033 = vmatpush1.msra.mxu0 0.0
    %1034 = vmatprep.subr.mxu0 0.0
    %1035 = vmatpush1.msra.mxu0 0.0
    %1036 = vmatprep.subr.mxu0 0.0
    %1037 = vmatpush1.msra.mxu0 0.0
    %1038 = vmatprep.subr.mxu0 0.0
    %1039 = vmatpush1.msra.mxu0 0.0
    %1040 = vmatprep.subr.mxu0 0.0
    %1041 = vmatpush1.msra.mxu0 0.0
    %1042 = vmatprep.subr.mxu0 0.0
    %1043 = vmatpush1.msra.mxu0 0.0
    %1044 = vmatprep.subr.mxu0 0.0
    %1045 = vmatpush1.msra.mxu0 0.0
    %1046 = vmatprep.subr.mxu0 0.0
    %1047 = vmatpush1.msra.mxu0 %v51
    %1048 = vmatprep.subr.mxu0 0.0
    %1049 = vmatpush1.msra.mxu0 %v50
    %1050 = vmatprep.subr.mxu0 0.0
    %1051 = vmatpush1.msra.mxu0 %v49
    %1052 = vmatprep.subr.mxu0 0.0
    %1053 = vmatpush1.msra.mxu0 %v48
    %1054 = vmatprep.subr.mxu0 0.0
    %1055 = vmatpush1.msra.mxu0 %v47
    %1056 = vmatprep.subr.mxu0 0.0
    %1057 = vmatpush1.msra.mxu0 %v46
    %1058 = vmatprep.subr.mxu0 0.0
    %1059 = vmatpush1.msra.mxu0 %v45
    %1060 = vmatprep.subr.mxu0 0.0
    %1061 = vmatpush1.msra.mxu0 %v44
    %1062 = vmatprep.subr.mxu0 0.0
    %1063 = vmatpush2.msra.mxu0 0.0
    %1064 = vmatprep.subr.mxu0 0.0
    %1065 = vmatpush2.msra.mxu0 0.0
    %1066 = vmatprep.subr.mxu0 0.0
    %1067 = vmatpush2.msra.mxu0 0.0
    %1068 = vmatprep.subr.mxu0 0.0
    %1069 = vmatpush2.msra.mxu0 0.0
    %1070 = vmatprep.subr.mxu0 0.0
    %1071 = vmatpush2.msra.mxu0 0.0
    %1072 = vmatprep.subr.mxu0 0.0
    %1073 = vmatpush2.msra.mxu0 0.0
    %1074 = vmatprep.subr.mxu0 0.0
    %1075 = vmatpush2.msra.mxu0 0.0
    %1076 = vmatprep.subr.mxu0 0.0
    %1077 = vmatpush2.msra.mxu0 0.0
    %1078 = vmatprep.subr.mxu0 0.0
    %1079 = vmatpush2.msra.mxu0 0.0
    %1080 = vmatprep.subr.mxu0 0.0
    %1081 = vmatpush2.msra.mxu0 0.0
    %1082 = vmatprep.subr.mxu0 0.0
    %1083 = vmatpush2.msra.mxu0 0.0
    %1084 = vmatprep.subr.mxu0 0.0
    %1085 = vmatpush2.msra.mxu0 0.0
    %1086 = vmatprep.subr.mxu0 0.0
    %1087 = vmatpush2.msra.mxu0 0.0
    %1088 = vmatprep.subr.mxu0 0.0
    %1089 = vmatpush2.msra.mxu0 0.0
    %1090 = vmatprep.subr.mxu0 0.0
    %1091 = vmatpush2.msra.mxu0 0.0
    %1092 = vmatprep.subr.mxu0 0.0
    %1093 = vmatpush2.msra.mxu0 0.0
    %1094 = vmatprep.mubr.f32.mxu0 0.0
    %1095 = vmatmul.mubr.f32.gmra.mxu0 %v1028
    %v1096 = vpop.f32.mrf.mxu0
    %v1097 = vadd.f32 %v324, %v1096
    %v1098 = vpop.f32.mrf.mxu0
    %1099 = vdwg.mxu0
    %v1100 = vmin.f32 %v1097, 20.0
    %v1101 = vmul.f32 %v1100, 1.442695
    %v1102 = vpow.pop %v1101
    %v1103 = vadd.f32 %v1102, 1.0
    %v1104 = vmul.f32 %v1103, %v1103
    %v1105 = vsub.f32 %v1104, 1.0
    %v1106 = vmul.f32 %v1097, %v1105
    %v1107 = vadd.f32 %v1104, 1.0
    %v1108 = vrcp.pop %v1107
    %v1109 = vmul.f32 %v1106, %v1108
    %v1111 = vsel %vm237, %v1109, 0
    %1113 = vmatprep.subr.mxu0 0.0
    %1114 = vmatpush1.msra.mxu0 0.0
    %1115 = vmatprep.subr.mxu0 0.0
    %1116 = vmatpush1.msra.mxu0 0.0
    %1117 = vmatprep.subr.mxu0 0.0
    %1118 = vmatpush1.msra.mxu0 0.0
    %1119 = vmatprep.subr.mxu0 0.0
    %1120 = vmatpush1.msra.mxu0 0.0
    %1121 = vmatprep.subr.mxu0 0.0
    %1122 = vmatpush1.msra.mxu0 0.0
    %1123 = vmatprep.subr.mxu0 0.0
    %1124 = vmatpush1.msra.mxu0 0.0
    %1125 = vmatprep.subr.mxu0 0.0
    %1126 = vmatpush1.msra.mxu0 0.0
    %1127 = vmatprep.subr.mxu0 0.0
    %1128 = vmatpush1.msra.mxu0 0.0
    %1129 = vmatprep.subr.mxu0 0.0
    %1130 = vmatpush1.msra.mxu0 %v63
    %1131 = vmatprep.subr.mxu0 0.0
    %1132 = vmatpush1.msra.mxu0 %v62
    %1133 = vmatprep.subr.mxu0 0.0
    %1134 = vmatpush1.msra.mxu0 %v61
    %1135 = vmatprep.subr.mxu0 0.0
    %1136 = vmatpush1.msra.mxu0 %v60
    %1137 = vmatprep.subr.mxu0 0.0
    %1138 = vmatpush1.msra.mxu0 %v59
    %1139 = vmatprep.subr.mxu0 0.0
    %1140 = vmatpush1.msra.mxu0 %v58
    %1141 = vmatprep.subr.mxu0 0.0
    %1142 = vmatpush1.msra.mxu0 %v57
    %1143 = vmatprep.subr.mxu0 0.0
    %1144 = vmatpush1.msra.mxu0 %v56
    %1145 = vmatprep.subr.mxu0 0.0
    %1146 = vmatpush2.msra.mxu0 0.0
    %1147 = vmatprep.subr.mxu0 0.0
    %1148 = vmatpush2.msra.mxu0 0.0
    %1149 = vmatprep.subr.mxu0 0.0
    %1150 = vmatpush2.msra.mxu0 0.0
    %1151 = vmatprep.subr.mxu0 0.0
    %1152 = vmatpush2.msra.mxu0 0.0
    %1153 = vmatprep.subr.mxu0 0.0
    %1154 = vmatpush2.msra.mxu0 0.0
    %1155 = vmatprep.subr.mxu0 0.0
    %1156 = vmatpush2.msra.mxu0 0.0
    %1157 = vmatprep.subr.mxu0 0.0
    %1158 = vmatpush2.msra.mxu0 0.0
    %1159 = vmatprep.subr.mxu0 0.0
    %1160 = vmatpush2.msra.mxu0 0.0
    %1161 = vmatprep.subr.mxu0 0.0
    %1162 = vmatpush2.msra.mxu0 0.0
    %1163 = vmatprep.subr.mxu0 0.0
    %1164 = vmatpush2.msra.mxu0 0.0
    %1165 = vmatprep.subr.mxu0 0.0
    %1166 = vmatpush2.msra.mxu0 0.0
    %1167 = vmatprep.subr.mxu0 0.0
    %1168 = vmatpush2.msra.mxu0 0.0
    %1169 = vmatprep.subr.mxu0 0.0
    %1170 = vmatpush2.msra.mxu0 0.0
    %1171 = vmatprep.subr.mxu0 0.0
    %1172 = vmatpush2.msra.mxu0 0.0
    %1173 = vmatprep.subr.mxu0 0.0
    %1174 = vmatpush2.msra.mxu0 0.0
    %1175 = vmatprep.subr.mxu0 0.0
    %1176 = vmatpush2.msra.mxu0 0.0
    %1177 = vmatprep.mubr.f32.mxu0 0.0
    %1178 = vmatmul.mubr.f32.gmra.mxu0 %v1111
    %v1179 = vpop.f32.mrf.mxu0
    %v1180 = vadd.f32 %v411, %v1179
    %v1181 = vpop.f32.mrf.mxu0
    %1182 = vdwg.mxu0
    %s1183 = sld [smem:[#allocation2 + $0x10]]
    %s1184 = sld [smem:[#allocation2 + $0x11]]
    %s1185 = sld [smem:[#allocation2 + $0x12]]
    %s1186 = sld [smem:[#allocation2 + $0x13]]
    %s1187 = sld [smem:[#allocation2 + $0x14]]
    %v1188 = vstv %s1183
    %v1189 = vmul.f32 %v1188, %v855
    %v1190 = vstv %s1184
    %v1191 = vmul.f32 %v1190, %v1180
    %v1192 = vsub.f32 %v1189, %v1191
    %v1193 = vmax.f32 %v1192, -1.0
    %v1194 = vmin.f32 %v1193, 1.0
    %v1195 = vstv %s1185
    %v1196 = vmul.f32 %v1195, %v1194
    %v1197 = vstv %s1186
    %v1198 = vmul.f32 %v1197, %v855
    %v1199 = vadd.f32 %v1196, %v1198
    %s1200 = scalar_lea.vmem %s1, 8
    %v1201 = vld [vmem:[%s1200] sm:$0xf]
    %v1202 = vstv %s1187
    %v1203 = vmul.f32 %v1202, %v1201
    %v1204 = vadd.f32 %v1199, %v1203
    %v1206 = vsel %vm140, %v1204, 0
    %1208 = vmatprep.subr.mxu0 0.0
    %1209 = vmatpush1.msra.mxu0 0.0
    %1210 = vmatprep.subr.mxu0 0.0
    %1211 = vmatpush1.msra.mxu0 0.0
    %1212 = vmatprep.subr.mxu0 0.0
    %1213 = vmatpush1.msra.mxu0 0.0
    %1214 = vmatprep.subr.mxu0 0.0
    %1215 = vmatpush1.msra.mxu0 0.0
    %1216 = vmatprep.subr.mxu0 0.0
    %1217 = vmatpush1.msra.mxu0 0.0
    %1218 = vmatprep.subr.mxu0 0.0
    %1219 = vmatpush1.msra.mxu0 0.0
    %1220 = vmatprep.subr.mxu0 0.0
    %1221 = vmatpush1.msra.mxu0 0.0
    %1222 = vmatprep.subr.mxu0 0.0
    %1223 = vmatpush1.msra.mxu0 0.0
    %1224 = vmatprep.subr.mxu0 0.0
    %1225 = vmatpush1.msra.mxu0 0.0
    %1226 = vmatprep.subr.mxu0 0.0
    %1227 = vmatpush1.msra.mxu0 0.0
    %1228 = vmatprep.subr.mxu0 0.0
    %1229 = vmatpush1.msra.mxu0 0.0
    %1230 = vmatprep.subr.mxu0 0.0
    %1231 = vmatpush1.msra.mxu0 0.0
    %1232 = vmatprep.subr.mxu0 0.0
    %1233 = vmatpush1.msra.mxu0 0.0
    %1234 = vmatprep.subr.mxu0 0.0
    %1235 = vmatpush1.msra.mxu0 0.0
    %1236 = vmatprep.subr.mxu0 0.0
    %1237 = vmatpush1.msra.mxu0 0.0
    %1238 = vmatprep.subr.mxu0 0.0
    %1239 = vmatpush1.msra.mxu0 %v146
    %1240 = vmatprep.subr.mxu0 0.0
    %1241 = vmatpush2.msra.mxu0 0.0
    %1242 = vmatprep.subr.mxu0 0.0
    %1243 = vmatpush2.msra.mxu0 0.0
    %1244 = vmatprep.subr.mxu0 0.0
    %1245 = vmatpush2.msra.mxu0 0.0
    %1246 = vmatprep.subr.mxu0 0.0
    %1247 = vmatpush2.msra.mxu0 0.0
    %1248 = vmatprep.subr.mxu0 0.0
    %1249 = vmatpush2.msra.mxu0 0.0
    %1250 = vmatprep.subr.mxu0 0.0
    %1251 = vmatpush2.msra.mxu0 0.0
    %1252 = vmatprep.subr.mxu0 0.0
    %1253 = vmatpush2.msra.mxu0 0.0
    %1254 = vmatprep.subr.mxu0 0.0
    %1255 = vmatpush2.msra.mxu0 0.0
    %1256 = vmatprep.subr.mxu0 0.0
    %1257 = vmatpush2.msra.mxu0 0.0
    %1258 = vmatprep.subr.mxu0 0.0
    %1259 = vmatpush2.msra.mxu0 0.0
    %1260 = vmatprep.subr.mxu0 0.0
    %1261 = vmatpush2.msra.mxu0 0.0
    %1262 = vmatprep.subr.mxu0 0.0
    %1263 = vmatpush2.msra.mxu0 0.0
    %1264 = vmatprep.subr.mxu0 0.0
    %1265 = vmatpush2.msra.mxu0 0.0
    %1266 = vmatprep.subr.mxu0 0.0
    %1267 = vmatpush2.msra.mxu0 0.0
    %1268 = vmatprep.subr.mxu0 0.0
    %1269 = vmatpush2.msra.mxu0 0.0
    %1270 = vmatprep.subr.mxu0 0.0
    %1271 = vmatpush2.msra.mxu0 0.0
    %1272 = vmatprep.mubr.f32.mxu0 0.0
    %1273 = vmatmul.mubr.f32.gmra.mxu0 %v1206
    %v1274 = vpop.f32.mrf.mxu0
    %v1275 = vadd.f32 %v137, %v1274
    %v1276 = vpop.f32.mrf.mxu0
    %1277 = vdwg.mxu0
    %v1278 = vlaneseq
    %v1279 = vshrl.u32 %v1278, 7
    %v1280 = vsub.s32 1, %v1279
    %v1281 = vrot.slane %v55, %v1280
    %v1282 = vadd.f32 %v1275, %v1281
    %v1283 = vmin.f32 %v1282, 20.0
    %v1284 = vmul.f32 %v1283, 1.442695
    %v1285 = vpow.pop %v1284
    %v1286 = vadd.f32 %v1285, 1.0
    %v1287 = vmul.f32 %v1286, %v1286
    %v1288 = vsub.f32 %v1287, 1.0
    %v1289 = vmul.f32 %v1282, %v1288
    %v1290 = vadd.f32 %v1287, 1.0
    %v1291 = vrcp.pop %v1290
    %v1292 = vmul.f32 %v1289, %v1291
    %v1294 = vsel %vm237, %v1292, 0
    %1296 = vmatprep.subr.mxu0 0.0
    %1297 = vmatpush1.msra.mxu0 0.0
    %1298 = vmatprep.subr.mxu0 0.0
    %1299 = vmatpush1.msra.mxu0 0.0
    %1300 = vmatprep.subr.mxu0 0.0
    %1301 = vmatpush1.msra.mxu0 0.0
    %1302 = vmatprep.subr.mxu0 0.0
    %1303 = vmatpush1.msra.mxu0 0.0
    %1304 = vmatprep.subr.mxu0 0.0
    %1305 = vmatpush1.msra.mxu0 0.0
    %1306 = vmatprep.subr.mxu0 0.0
    %1307 = vmatpush1.msra.mxu0 0.0
    %1308 = vmatprep.subr.mxu0 0.0
    %1309 = vmatpush1.msra.mxu0 0.0
    %1310 = vmatprep.subr.mxu0 0.0
    %1311 = vmatpush1.msra.mxu0 0.0
    %1312 = vmatprep.subr.mxu0 0.0
    %1313 = vmatpush1.msra.mxu0 %v43
    %1314 = vmatprep.subr.mxu0 0.0
    %1315 = vmatpush1.msra.mxu0 %v42
    %1316 = vmatprep.subr.mxu0 0.0
    %1317 = vmatpush1.msra.mxu0 %v41
    %1318 = vmatprep.subr.mxu0 0.0
    %1319 = vmatpush1.msra.mxu0 %v40
    %1320 = vmatprep.subr.mxu0 0.0
    %1321 = vmatpush1.msra.mxu0 %v39
    %1322 = vmatprep.subr.mxu0 0.0
    %1323 = vmatpush1.msra.mxu0 %v38
    %1324 = vmatprep.subr.mxu0 0.0
    %1325 = vmatpush1.msra.mxu0 %v37
    %1326 = vmatprep.subr.mxu0 0.0
    %1327 = vmatpush1.msra.mxu0 %v36
    %1328 = vmatprep.subr.mxu0 0.0
    %1329 = vmatpush2.msra.mxu0 0.0
    %1330 = vmatprep.subr.mxu0 0.0
    %1331 = vmatpush2.msra.mxu0 0.0
    %1332 = vmatprep.subr.mxu0 0.0
    %1333 = vmatpush2.msra.mxu0 0.0
    %1334 = vmatprep.subr.mxu0 0.0
    %1335 = vmatpush2.msra.mxu0 0.0
    %1336 = vmatprep.subr.mxu0 0.0
    %1337 = vmatpush2.msra.mxu0 0.0
    %1338 = vmatprep.subr.mxu0 0.0
    %1339 = vmatpush2.msra.mxu0 0.0
    %1340 = vmatprep.subr.mxu0 0.0
    %1341 = vmatpush2.msra.mxu0 0.0
    %1342 = vmatprep.subr.mxu0 0.0
    %1343 = vmatpush2.msra.mxu0 0.0
    %1344 = vmatprep.subr.mxu0 0.0
    %1345 = vmatpush2.msra.mxu0 0.0
    %1346 = vmatprep.subr.mxu0 0.0
    %1347 = vmatpush2.msra.mxu0 0.0
    %1348 = vmatprep.subr.mxu0 0.0
    %1349 = vmatpush2.msra.mxu0 0.0
    %1350 = vmatprep.subr.mxu0 0.0
    %1351 = vmatpush2.msra.mxu0 0.0
    %1352 = vmatprep.subr.mxu0 0.0
    %1353 = vmatpush2.msra.mxu0 0.0
    %1354 = vmatprep.subr.mxu0 0.0
    %1355 = vmatpush2.msra.mxu0 0.0
    %1356 = vmatprep.subr.mxu0 0.0
    %1357 = vmatpush2.msra.mxu0 0.0
    %1358 = vmatprep.subr.mxu0 0.0
    %1359 = vmatpush2.msra.mxu0 0.0
    %1360 = vmatprep.mubr.f32.mxu0 0.0
    %1361 = vmatmul.mubr.f32.gmra.mxu0 %v1294
    %v1362 = vpop.f32.mrf.mxu0
    %v1363 = vadd.f32 %v236, %v1362
    %v1364 = vpop.f32.mrf.mxu0
    %1365 = vdwg.mxu0
    %v1366 = vmin.f32 %v1363, 20.0
    %v1367 = vmul.f32 %v1366, 1.442695
    %v1368 = vpow.pop %v1367
    %v1369 = vadd.f32 %v1368, 1.0
    %v1370 = vmul.f32 %v1369, %v1369
    %v1371 = vsub.f32 %v1370, 1.0
    %v1372 = vmul.f32 %v1363, %v1371
    %v1373 = vadd.f32 %v1370, 1.0
    %v1374 = vrcp.pop %v1373
    %v1375 = vmul.f32 %v1372, %v1374
    %v1377 = vsel %vm237, %v1375, 0
    %1379 = vmatprep.subr.mxu0 0.0
    %1380 = vmatpush1.msra.mxu0 0.0
    %1381 = vmatprep.subr.mxu0 0.0
    %1382 = vmatpush1.msra.mxu0 0.0
    %1383 = vmatprep.subr.mxu0 0.0
    %1384 = vmatpush1.msra.mxu0 0.0
    %1385 = vmatprep.subr.mxu0 0.0
    %1386 = vmatpush1.msra.mxu0 0.0
    %1387 = vmatprep.subr.mxu0 0.0
    %1388 = vmatpush1.msra.mxu0 0.0
    %1389 = vmatprep.subr.mxu0 0.0
    %1390 = vmatpush1.msra.mxu0 0.0
    %1391 = vmatprep.subr.mxu0 0.0
    %1392 = vmatpush1.msra.mxu0 0.0
    %1393 = vmatprep.subr.mxu0 0.0
    %1394 = vmatpush1.msra.mxu0 0.0
    %1395 = vmatprep.subr.mxu0 0.0
    %1396 = vmatpush1.msra.mxu0 %v51
    %1397 = vmatprep.subr.mxu0 0.0
    %1398 = vmatpush1.msra.mxu0 %v50
    %1399 = vmatprep.subr.mxu0 0.0
    %1400 = vmatpush1.msra.mxu0 %v49
    %1401 = vmatprep.subr.mxu0 0.0
    %1402 = vmatpush1.msra.mxu0 %v48
    %1403 = vmatprep.subr.mxu0 0.0
    %1404 = vmatpush1.msra.mxu0 %v47
    %1405 = vmatprep.subr.mxu0 0.0
    %1406 = vmatpush1.msra.mxu0 %v46
    %1407 = vmatprep.subr.mxu0 0.0
    %1408 = vmatpush1.msra.mxu0 %v45
    %1409 = vmatprep.subr.mxu0 0.0
    %1410 = vmatpush1.msra.mxu0 %v44
    %1411 = vmatprep.subr.mxu0 0.0
    %1412 = vmatpush2.msra.mxu0 0.0
    %1413 = vmatprep.subr.mxu0 0.0
    %1414 = vmatpush2.msra.mxu0 0.0
    %1415 = vmatprep.subr.mxu0 0.0
    %1416 = vmatpush2.msra.mxu0 0.0
    %1417 = vmatprep.subr.mxu0 0.0
    %1418 = vmatpush2.msra.mxu0 0.0
    %1419 = vmatprep.subr.mxu0 0.0
    %1420 = vmatpush2.msra.mxu0 0.0
    %1421 = vmatprep.subr.mxu0 0.0
    %1422 = vmatpush2.msra.mxu0 0.0
    %1423 = vmatprep.subr.mxu0 0.0
    %1424 = vmatpush2.msra.mxu0 0.0
    %1425 = vmatprep.subr.mxu0 0.0
    %1426 = vmatpush2.msra.mxu0 0.0
    %1427 = vmatprep.subr.mxu0 0.0
    %1428 = vmatpush2.msra.mxu0 0.0
    %1429 = vmatprep.subr.mxu0 0.0
    %1430 = vmatpush2.msra.mxu0 0.0
    %1431 = vmatprep.subr.mxu0 0.0
    %1432 = vmatpush2.msra.mxu0 0.0
    %1433 = vmatprep.subr.mxu0 0.0
    %1434 = vmatpush2.msra.mxu0 0.0
    %1435 = vmatprep.subr.mxu0 0.0
    %1436 = vmatpush2.msra.mxu0 0.0
    %1437 = vmatprep.subr.mxu0 0.0
    %1438 = vmatpush2.msra.mxu0 0.0
    %1439 = vmatprep.subr.mxu0 0.0
    %1440 = vmatpush2.msra.mxu0 0.0
    %1441 = vmatprep.subr.mxu0 0.0
    %1442 = vmatpush2.msra.mxu0 0.0
    %1443 = vmatprep.mubr.f32.mxu0 0.0
    %1444 = vmatmul.mubr.f32.gmra.mxu0 %v1377
    %v1445 = vpop.f32.mrf.mxu0
    %v1446 = vadd.f32 %v324, %v1445
    %v1447 = vpop.f32.mrf.mxu0
    %1448 = vdwg.mxu0
    %v1449 = vmin.f32 %v1446, 20.0
    %v1450 = vmul.f32 %v1449, 1.442695
    %v1451 = vpow.pop %v1450
    %v1452 = vadd.f32 %v1451, 1.0
    %v1453 = vmul.f32 %v1452, %v1452
    %v1454 = vsub.f32 %v1453, 1.0
    %v1455 = vmul.f32 %v1446, %v1454
    %v1456 = vadd.f32 %v1453, 1.0
    %v1457 = vrcp.pop %v1456
    %v1458 = vmul.f32 %v1455, %v1457
    %v1460 = vsel %vm237, %v1458, 0
    %1462 = vmatprep.subr.mxu0 0.0
    %1463 = vmatpush1.msra.mxu0 0.0
    %1464 = vmatprep.subr.mxu0 0.0
    %1465 = vmatpush1.msra.mxu0 0.0
    %1466 = vmatprep.subr.mxu0 0.0
    %1467 = vmatpush1.msra.mxu0 0.0
    %1468 = vmatprep.subr.mxu0 0.0
    %1469 = vmatpush1.msra.mxu0 0.0
    %1470 = vmatprep.subr.mxu0 0.0
    %1471 = vmatpush1.msra.mxu0 0.0
    %1472 = vmatprep.subr.mxu0 0.0
    %1473 = vmatpush1.msra.mxu0 0.0
    %1474 = vmatprep.subr.mxu0 0.0
    %1475 = vmatpush1.msra.mxu0 0.0
    %1476 = vmatprep.subr.mxu0 0.0
    %1477 = vmatpush1.msra.mxu0 0.0
    %1478 = vmatprep.subr.mxu0 0.0
    %1479 = vmatpush1.msra.mxu0 %v63
    %1480 = vmatprep.subr.mxu0 0.0
    %1481 = vmatpush1.msra.mxu0 %v62
    %1482 = vmatprep.subr.mxu0 0.0
    %1483 = vmatpush1.msra.mxu0 %v61
    %1484 = vmatprep.subr.mxu0 0.0
    %1485 = vmatpush1.msra.mxu0 %v60
    %1486 = vmatprep.subr.mxu0 0.0
    %1487 = vmatpush1.msra.mxu0 %v59
    %1488 = vmatprep.subr.mxu0 0.0
    %1489 = vmatpush1.msra.mxu0 %v58
    %1490 = vmatprep.subr.mxu0 0.0
    %1491 = vmatpush1.msra.mxu0 %v57
    %1492 = vmatprep.subr.mxu0 0.0
    %1493 = vmatpush1.msra.mxu0 %v56
    %1494 = vmatprep.subr.mxu0 0.0
    %1495 = vmatpush2.msra.mxu0 0.0
    %1496 = vmatprep.subr.mxu0 0.0
    %1497 = vmatpush2.msra.mxu0 0.0
    %1498 = vmatprep.subr.mxu0 0.0
    %1499 = vmatpush2.msra.mxu0 0.0
    %1500 = vmatprep.subr.mxu0 0.0
    %1501 = vmatpush2.msra.mxu0 0.0
    %1502 = vmatprep.subr.mxu0 0.0
    %1503 = vmatpush2.msra.mxu0 0.0
    %1504 = vmatprep.subr.mxu0 0.0
    %1505 = vmatpush2.msra.mxu0 0.0
    %1506 = vmatprep.subr.mxu0 0.0
    %1507 = vmatpush2.msra.mxu0 0.0
    %1508 = vmatprep.subr.mxu0 0.0
    %1509 = vmatpush2.msra.mxu0 0.0
    %1510 = vmatprep.subr.mxu0 0.0
    %1511 = vmatpush2.msra.mxu0 0.0
    %1512 = vmatprep.subr.mxu0 0.0
    %1513 = vmatpush2.msra.mxu0 0.0
    %1514 = vmatprep.subr.mxu0 0.0
    %1515 = vmatpush2.msra.mxu0 0.0
    %1516 = vmatprep.subr.mxu0 0.0
    %1517 = vmatpush2.msra.mxu0 0.0
    %1518 = vmatprep.subr.mxu0 0.0
    %1519 = vmatpush2.msra.mxu0 0.0
    %1520 = vmatprep.subr.mxu0 0.0
    %1521 = vmatpush2.msra.mxu0 0.0
    %1522 = vmatprep.subr.mxu0 0.0
    %1523 = vmatpush2.msra.mxu0 0.0
    %1524 = vmatprep.subr.mxu0 0.0
    %1525 = vmatpush2.msra.mxu0 0.0
    %1526 = vmatprep.mubr.f32.mxu0 0.0
    %1527 = vmatmul.mubr.f32.gmra.mxu0 %v1460
    %v1528 = vpop.f32.mrf.mxu0
    %v1529 = vadd.f32 %v411, %v1528
    %v1530 = vpop.f32.mrf.mxu0
    %1531 = vdwg.mxu0
    %s1532 = sld [smem:[#allocation2 + $0x8]]
    %s1533 = sld [smem:[#allocation2 + $0x9]]
    %s1534 = sld [smem:[#allocation2 + $0xa]]
    %s1535 = sld [smem:[#allocation2 + $0xb]]
    %s1536 = sld [smem:[#allocation2 + $0xc]]
    %v1537 = vstv %s1532
    %v1538 = vmul.f32 %v1537, %v1204
    %v1539 = vstv %s1533
    %v1540 = vmul.f32 %v1539, %v1529
    %v1541 = vsub.f32 %v1538, %v1540
    %v1542 = vmax.f32 %v1541, -1.0
    %v1543 = vmin.f32 %v1542, 1.0
    %v1544 = vstv %s1534
    %v1545 = vmul.f32 %v1544, %v1543
    %v1546 = vstv %s1535
    %v1547 = vmul.f32 %v1546, %v1204
    %v1548 = vadd.f32 %v1545, %v1547
    %s1549 = scalar_lea.vmem %s1, 4
    %v1550 = vld [vmem:[%s1549] sm:$0xf]
    %v1551 = vstv %s1536
    %v1552 = vmul.f32 %v1551, %v1550
    %v1553 = vadd.f32 %v1548, %v1552
    %v1555 = vsel %vm140, %v1553, 0
    %1557 = vmatprep.subr.mxu0 0.0
    %1558 = vmatpush1.msra.mxu0 0.0
    %1559 = vmatprep.subr.mxu0 0.0
    %1560 = vmatpush1.msra.mxu0 0.0
    %1561 = vmatprep.subr.mxu0 0.0
    %1562 = vmatpush1.msra.mxu0 0.0
    %1563 = vmatprep.subr.mxu0 0.0
    %1564 = vmatpush1.msra.mxu0 0.0
    %1565 = vmatprep.subr.mxu0 0.0
    %1566 = vmatpush1.msra.mxu0 0.0
    %1567 = vmatprep.subr.mxu0 0.0
    %1568 = vmatpush1.msra.mxu0 0.0
    %1569 = vmatprep.subr.mxu0 0.0
    %1570 = vmatpush1.msra.mxu0 0.0
    %1571 = vmatprep.subr.mxu0 0.0
    %1572 = vmatpush1.msra.mxu0 0.0
    %1573 = vmatprep.subr.mxu0 0.0
    %1574 = vmatpush1.msra.mxu0 0.0
    %1575 = vmatprep.subr.mxu0 0.0
    %1576 = vmatpush1.msra.mxu0 0.0
    %1577 = vmatprep.subr.mxu0 0.0
    %1578 = vmatpush1.msra.mxu0 0.0
    %1579 = vmatprep.subr.mxu0 0.0
    %1580 = vmatpush1.msra.mxu0 0.0
    %1581 = vmatprep.subr.mxu0 0.0
    %1582 = vmatpush1.msra.mxu0 0.0
    %1583 = vmatprep.subr.mxu0 0.0
    %1584 = vmatpush1.msra.mxu0 0.0
    %1585 = vmatprep.subr.mxu0 0.0
    %1586 = vmatpush1.msra.mxu0 0.0
    %1587 = vmatprep.subr.mxu0 0.0
    %1588 = vmatpush1.msra.mxu0 %v146
    %1589 = vmatprep.subr.mxu0 0.0
    %1590 = vmatpush2.msra.mxu0 0.0
    %1591 = vmatprep.subr.mxu0 0.0
    %1592 = vmatpush2.msra.mxu0 0.0
    %1593 = vmatprep.subr.mxu0 0.0
    %1594 = vmatpush2.msra.mxu0 0.0
    %1595 = vmatprep.subr.mxu0 0.0
    %1596 = vmatpush2.msra.mxu0 0.0
    %1597 = vmatprep.subr.mxu0 0.0
    %1598 = vmatpush2.msra.mxu0 0.0
    %1599 = vmatprep.subr.mxu0 0.0
    %1600 = vmatpush2.msra.mxu0 0.0
    %1601 = vmatprep.subr.mxu0 0.0
    %1602 = vmatpush2.msra.mxu0 0.0
    %1603 = vmatprep.subr.mxu0 0.0
    %1604 = vmatpush2.msra.mxu0 0.0
    %1605 = vmatprep.subr.mxu0 0.0
    %1606 = vmatpush2.msra.mxu0 0.0
    %1607 = vmatprep.subr.mxu0 0.0
    %1608 = vmatpush2.msra.mxu0 0.0
    %1609 = vmatprep.subr.mxu0 0.0
    %1610 = vmatpush2.msra.mxu0 0.0
    %1611 = vmatprep.subr.mxu0 0.0
    %1612 = vmatpush2.msra.mxu0 0.0
    %1613 = vmatprep.subr.mxu0 0.0
    %1614 = vmatpush2.msra.mxu0 0.0
    %1615 = vmatprep.subr.mxu0 0.0
    %1616 = vmatpush2.msra.mxu0 0.0
    %1617 = vmatprep.subr.mxu0 0.0
    %1618 = vmatpush2.msra.mxu0 0.0
    %1619 = vmatprep.subr.mxu0 0.0
    %1620 = vmatpush2.msra.mxu0 0.0
    %1621 = vmatprep.mubr.f32.mxu0 0.0
    %1622 = vmatmul.mubr.f32.gmra.mxu0 %v1555
    %v1623 = vpop.f32.mrf.mxu0
    %v1624 = vadd.f32 %v137, %v1623
    %v1625 = vpop.f32.mrf.mxu0
    %1626 = vdwg.mxu0
    %v1627 = vlaneseq
    %v1628 = vshrl.u32 %v1627, 7
    %v1629 = vsub.s32 0, %v1628
    %v1630 = vrot.slane %v55, %v1629
    %v1631 = vadd.f32 %v1624, %v1630
    %v1632 = vmin.f32 %v1631, 20.0
    %v1633 = vmul.f32 %v1632, 1.442695
    %v1634 = vpow.pop %v1633
    %v1635 = vadd.f32 %v1634, 1.0
    %v1636 = vmul.f32 %v1635, %v1635
    %v1637 = vsub.f32 %v1636, 1.0
    %v1638 = vmul.f32 %v1631, %v1637
    %v1639 = vadd.f32 %v1636, 1.0
    %v1640 = vrcp.pop %v1639
    %v1641 = vmul.f32 %v1638, %v1640
    %v1643 = vsel %vm237, %v1641, 0
    %1645 = vmatprep.subr.mxu0 0.0
    %1646 = vmatpush1.msra.mxu0 0.0
    %1647 = vmatprep.subr.mxu0 0.0
    %1648 = vmatpush1.msra.mxu0 0.0
    %1649 = vmatprep.subr.mxu0 0.0
    %1650 = vmatpush1.msra.mxu0 0.0
    %1651 = vmatprep.subr.mxu0 0.0
    %1652 = vmatpush1.msra.mxu0 0.0
    %1653 = vmatprep.subr.mxu0 0.0
    %1654 = vmatpush1.msra.mxu0 0.0
    %1655 = vmatprep.subr.mxu0 0.0
    %1656 = vmatpush1.msra.mxu0 0.0
    %1657 = vmatprep.subr.mxu0 0.0
    %1658 = vmatpush1.msra.mxu0 0.0
    %1659 = vmatprep.subr.mxu0 0.0
    %1660 = vmatpush1.msra.mxu0 0.0
    %1661 = vmatprep.subr.mxu0 0.0
    %1662 = vmatpush1.msra.mxu0 %v43
    %1663 = vmatprep.subr.mxu0 0.0
    %1664 = vmatpush1.msra.mxu0 %v42
    %1665 = vmatprep.subr.mxu0 0.0
    %1666 = vmatpush1.msra.mxu0 %v41
    %1667 = vmatprep.subr.mxu0 0.0
    %1668 = vmatpush1.msra.mxu0 %v40
    %1669 = vmatprep.subr.mxu0 0.0
    %1670 = vmatpush1.msra.mxu0 %v39
    %1671 = vmatprep.subr.mxu0 0.0
    %1672 = vmatpush1.msra.mxu0 %v38
    %1673 = vmatprep.subr.mxu0 0.0
    %1674 = vmatpush1.msra.mxu0 %v37
    %1675 = vmatprep.subr.mxu0 0.0
    %1676 = vmatpush1.msra.mxu0 %v36
    %1677 = vmatprep.subr.mxu0 0.0
    %1678 = vmatpush2.msra.mxu0 0.0
    %1679 = vmatprep.subr.mxu0 0.0
    %1680 = vmatpush2.msra.mxu0 0.0
    %1681 = vmatprep.subr.mxu0 0.0
    %1682 = vmatpush2.msra.mxu0 0.0
    %1683 = vmatprep.subr.mxu0 0.0
    %1684 = vmatpush2.msra.mxu0 0.0
    %1685 = vmatprep.subr.mxu0 0.0
    %1686 = vmatpush2.msra.mxu0 0.0
    %1687 = vmatprep.subr.mxu0 0.0
    %1688 = vmatpush2.msra.mxu0 0.0
    %1689 = vmatprep.subr.mxu0 0.0
    %1690 = vmatpush2.msra.mxu0 0.0
    %1691 = vmatprep.subr.mxu0 0.0
    %1692 = vmatpush2.msra.mxu0 0.0
    %1693 = vmatprep.subr.mxu0 0.0
    %1694 = vmatpush2.msra.mxu0 0.0
    %1695 = vmatprep.subr.mxu0 0.0
    %1696 = vmatpush2.msra.mxu0 0.0
    %1697 = vmatprep.subr.mxu0 0.0
    %1698 = vmatpush2.msra.mxu0 0.0
    %1699 = vmatprep.subr.mxu0 0.0
    %1700 = vmatpush2.msra.mxu0 0.0
    %1701 = vmatprep.subr.mxu0 0.0
    %1702 = vmatpush2.msra.mxu0 0.0
    %1703 = vmatprep.subr.mxu0 0.0
    %1704 = vmatpush2.msra.mxu0 0.0
    %1705 = vmatprep.subr.mxu0 0.0
    %1706 = vmatpush2.msra.mxu0 0.0
    %1707 = vmatprep.subr.mxu0 0.0
    %1708 = vmatpush2.msra.mxu0 0.0
    %1709 = vmatprep.mubr.f32.mxu0 0.0
    %1710 = vmatmul.mubr.f32.gmra.mxu0 %v1643
    %v1711 = vpop.f32.mrf.mxu0
    %v1712 = vadd.f32 %v236, %v1711
    %v1713 = vpop.f32.mrf.mxu0
    %1714 = vdwg.mxu0
    %v1715 = vmin.f32 %v1712, 20.0
    %v1716 = vmul.f32 %v1715, 1.442695
    %v1717 = vpow.pop %v1716
    %v1718 = vadd.f32 %v1717, 1.0
    %v1719 = vmul.f32 %v1718, %v1718
    %v1720 = vsub.f32 %v1719, 1.0
    %v1721 = vmul.f32 %v1712, %v1720
    %v1722 = vadd.f32 %v1719, 1.0
    %v1723 = vrcp.pop %v1722
    %v1724 = vmul.f32 %v1721, %v1723
    %v1726 = vsel %vm237, %v1724, 0
    %1728 = vmatprep.subr.mxu0 0.0
    %1729 = vmatpush1.msra.mxu0 0.0
    %1730 = vmatprep.subr.mxu0 0.0
    %1731 = vmatpush1.msra.mxu0 0.0
    %1732 = vmatprep.subr.mxu0 0.0
    %1733 = vmatpush1.msra.mxu0 0.0
    %1734 = vmatprep.subr.mxu0 0.0
    %1735 = vmatpush1.msra.mxu0 0.0
    %1736 = vmatprep.subr.mxu0 0.0
    %1737 = vmatpush1.msra.mxu0 0.0
    %1738 = vmatprep.subr.mxu0 0.0
    %1739 = vmatpush1.msra.mxu0 0.0
    %1740 = vmatprep.subr.mxu0 0.0
    %1741 = vmatpush1.msra.mxu0 0.0
    %1742 = vmatprep.subr.mxu0 0.0
    %1743 = vmatpush1.msra.mxu0 0.0
    %1744 = vmatprep.subr.mxu0 0.0
    %1745 = vmatpush1.msra.mxu0 %v51
    %1746 = vmatprep.subr.mxu0 0.0
    %1747 = vmatpush1.msra.mxu0 %v50
    %1748 = vmatprep.subr.mxu0 0.0
    %1749 = vmatpush1.msra.mxu0 %v49
    %1750 = vmatprep.subr.mxu0 0.0
    %1751 = vmatpush1.msra.mxu0 %v48
    %1752 = vmatprep.subr.mxu0 0.0
    %1753 = vmatpush1.msra.mxu0 %v47
    %1754 = vmatprep.subr.mxu0 0.0
    %1755 = vmatpush1.msra.mxu0 %v46
    %1756 = vmatprep.subr.mxu0 0.0
    %1757 = vmatpush1.msra.mxu0 %v45
    %1758 = vmatprep.subr.mxu0 0.0
    %1759 = vmatpush1.msra.mxu0 %v44
    %1760 = vmatprep.subr.mxu0 0.0
    %1761 = vmatpush2.msra.mxu0 0.0
    %1762 = vmatprep.subr.mxu0 0.0
    %1763 = vmatpush2.msra.mxu0 0.0
    %1764 = vmatprep.subr.mxu0 0.0
    %1765 = vmatpush2.msra.mxu0 0.0
    %1766 = vmatprep.subr.mxu0 0.0
    %1767 = vmatpush2.msra.mxu0 0.0
    %1768 = vmatprep.subr.mxu0 0.0
    %1769 = vmatpush2.msra.mxu0 0.0
    %1770 = vmatprep.subr.mxu0 0.0
    %1771 = vmatpush2.msra.mxu0 0.0
    %1772 = vmatprep.subr.mxu0 0.0
    %1773 = vmatpush2.msra.mxu0 0.0
    %1774 = vmatprep.subr.mxu0 0.0
    %1775 = vmatpush2.msra.mxu0 0.0
    %1776 = vmatprep.subr.mxu0 0.0
    %1777 = vmatpush2.msra.mxu0 0.0
    %1778 = vmatprep.subr.mxu0 0.0
    %1779 = vmatpush2.msra.mxu0 0.0
    %1780 = vmatprep.subr.mxu0 0.0
    %1781 = vmatpush2.msra.mxu0 0.0
    %1782 = vmatprep.subr.mxu0 0.0
    %1783 = vmatpush2.msra.mxu0 0.0
    %1784 = vmatprep.subr.mxu0 0.0
    %1785 = vmatpush2.msra.mxu0 0.0
    %1786 = vmatprep.subr.mxu0 0.0
    %1787 = vmatpush2.msra.mxu0 0.0
    %1788 = vmatprep.subr.mxu0 0.0
    %1789 = vmatpush2.msra.mxu0 0.0
    %1790 = vmatprep.subr.mxu0 0.0
    %1791 = vmatpush2.msra.mxu0 0.0
    %1792 = vmatprep.mubr.f32.mxu0 0.0
    %1793 = vmatmul.mubr.f32.gmra.mxu0 %v1726
    %v1794 = vpop.f32.mrf.mxu0
    %v1795 = vadd.f32 %v324, %v1794
    %v1796 = vpop.f32.mrf.mxu0
    %1797 = vdwg.mxu0
    %v1798 = vmin.f32 %v1795, 20.0
    %v1799 = vmul.f32 %v1798, 1.442695
    %v1800 = vpow.pop %v1799
    %v1801 = vadd.f32 %v1800, 1.0
    %v1802 = vmul.f32 %v1801, %v1801
    %v1803 = vsub.f32 %v1802, 1.0
    %v1804 = vmul.f32 %v1795, %v1803
    %v1805 = vadd.f32 %v1802, 1.0
    %v1806 = vrcp.pop %v1805
    %v1807 = vmul.f32 %v1804, %v1806
    %v1809 = vsel %vm237, %v1807, 0
    %1811 = vmatprep.subr.mxu0 0.0
    %1812 = vmatpush1.msra.mxu0 0.0
    %1813 = vmatprep.subr.mxu0 0.0
    %1814 = vmatpush1.msra.mxu0 0.0
    %1815 = vmatprep.subr.mxu0 0.0
    %1816 = vmatpush1.msra.mxu0 0.0
    %1817 = vmatprep.subr.mxu0 0.0
    %1818 = vmatpush1.msra.mxu0 0.0
    %1819 = vmatprep.subr.mxu0 0.0
    %1820 = vmatpush1.msra.mxu0 0.0
    %1821 = vmatprep.subr.mxu0 0.0
    %1822 = vmatpush1.msra.mxu0 0.0
    %1823 = vmatprep.subr.mxu0 0.0
    %1824 = vmatpush1.msra.mxu0 0.0
    %1825 = vmatprep.subr.mxu0 0.0
    %1826 = vmatpush1.msra.mxu0 0.0
    %1827 = vmatprep.subr.mxu0 0.0
    %1828 = vmatpush1.msra.mxu0 %v63
    %1829 = vmatprep.subr.mxu0 0.0
    %1830 = vmatpush1.msra.mxu0 %v62
    %1831 = vmatprep.subr.mxu0 0.0
    %1832 = vmatpush1.msra.mxu0 %v61
    %1833 = vmatprep.subr.mxu0 0.0
    %1834 = vmatpush1.msra.mxu0 %v60
    %1835 = vmatprep.subr.mxu0 0.0
    %1836 = vmatpush1.msra.mxu0 %v59
    %1837 = vmatprep.subr.mxu0 0.0
    %1838 = vmatpush1.msra.mxu0 %v58
    %1839 = vmatprep.subr.mxu0 0.0
    %1840 = vmatpush1.msra.mxu0 %v57
    %1841 = vmatprep.subr.mxu0 0.0
    %1842 = vmatpush1.msra.mxu0 %v56
    %1843 = vmatprep.subr.mxu0 0.0
    %1844 = vmatpush2.msra.mxu0 0.0
    %1845 = vmatprep.subr.mxu0 0.0
    %1846 = vmatpush2.msra.mxu0 0.0
    %1847 = vmatprep.subr.mxu0 0.0
    %1848 = vmatpush2.msra.mxu0 0.0
    %1849 = vmatprep.subr.mxu0 0.0
    %1850 = vmatpush2.msra.mxu0 0.0
    %1851 = vmatprep.subr.mxu0 0.0
    %1852 = vmatpush2.msra.mxu0 0.0
    %1853 = vmatprep.subr.mxu0 0.0
    %1854 = vmatpush2.msra.mxu0 0.0
    %1855 = vmatprep.subr.mxu0 0.0
    %1856 = vmatpush2.msra.mxu0 0.0
    %1857 = vmatprep.subr.mxu0 0.0
    %1858 = vmatpush2.msra.mxu0 0.0
    %1859 = vmatprep.subr.mxu0 0.0
    %1860 = vmatpush2.msra.mxu0 0.0
    %1861 = vmatprep.subr.mxu0 0.0
    %1862 = vmatpush2.msra.mxu0 0.0
    %1863 = vmatprep.subr.mxu0 0.0
    %1864 = vmatpush2.msra.mxu0 0.0
    %1865 = vmatprep.subr.mxu0 0.0
    %1866 = vmatpush2.msra.mxu0 0.0
    %1867 = vmatprep.subr.mxu0 0.0
    %1868 = vmatpush2.msra.mxu0 0.0
    %1869 = vmatprep.subr.mxu0 0.0
    %1870 = vmatpush2.msra.mxu0 0.0
    %1871 = vmatprep.subr.mxu0 0.0
    %1872 = vmatpush2.msra.mxu0 0.0
    %1873 = vmatprep.subr.mxu0 0.0
    %1874 = vmatpush2.msra.mxu0 0.0
    %1875 = vmatprep.mubr.f32.mxu0 0.0
    %1876 = vmatmul.mubr.f32.gmra.mxu0 %v1809
    %v1877 = vpop.f32.mrf.mxu0
    %v1878 = vadd.f32 %v411, %v1877
    %v1879 = vpop.f32.mrf.mxu0
    %1880 = vdwg.mxu0
    %s1881 = sld [smem:[#allocation2]]
    %s1882 = sld [smem:[#allocation2 + $0x1]]
    %s1883 = sld [smem:[#allocation2 + $0x2]]
    %s1884 = sld [smem:[#allocation2 + $0x3]]
    %s1885 = sld [smem:[#allocation2 + $0x4]]
    %v1886 = vstv %s1881
    %v1887 = vmul.f32 %v1886, %v1553
    %v1888 = vstv %s1882
    %v1889 = vmul.f32 %v1888, %v1878
    %v1890 = vsub.f32 %v1887, %v1889
    %v1891 = vmax.f32 %v1890, -1.0
    %v1892 = vmin.f32 %v1891, 1.0
    %v1893 = vstv %s1883
    %v1894 = vmul.f32 %v1893, %v1892
    %v1895 = vstv %s1884
    %v1896 = vmul.f32 %v1895, %v1553
    %v1897 = vadd.f32 %v1894, %v1896
    %v1898 = vld [vmem:[%s1] sm:$0xf]
    %v1899 = vstv %s1885
    %v1900 = vmul.f32 %v1899, %v1898
    %v1901 = vadd.f32 %v1897, %v1900
    %v1902 = vmax.f32 %v1901, -1.0
    %v1903 = vmin.f32 %v1902, 1.0
    %vm1904 = vcmask 44032
    %1905 = vst.msk [vmem:[#allocation5] sm:$0xf] %vm1904, %v1903
    // Predicated region
    $region26: #{diffusion_mac_forward.1} parent=1 // pred_check
      _
    $region27: #{diffusion_mac_forward.1} parent=1 // pred_check_branch
      %1907 = sbr.rel (0) target = $region29
    $region28: #{diffusion_mac_forward.1} parent=1 // pred_region
      %s1909 = ssub.s32 64, 64
      %1910 = vsyncadd [#allocation3], %s1909
      %s1912 = sshll.u32 [#allocation5], 4
      %s1913 = int_to_ptr.vmem [resolvable:$true] %s1912
      %1915 = dma.vmem_to_hbm [thread:$0]  %s1913, 64, %s5, [#allocation3]
    $region29: #{diffusion_mac_forward.1} parent=1 // pred_fallthru
      _
    // Predicated region
    $region30: #{diffusion_mac_forward.1} parent=1 // pred_check
      _
    $region31: #{diffusion_mac_forward.1} parent=1 // pred_check_branch
      %1917 = sbr.rel (0) target = $region33
    $region32: #{diffusion_mac_forward.1} parent=1 // pred_region
      %1918 = dma.done [#allocation3], 64
    $region33: #{diffusion_mac_forward.1} parent=1 // pred_fallthru
      _
    %1919 = vsyncpa [#allocation3], 1
    %1920 = vsyncpa [#allocation4], 1

</llo_original>
